<compile_context>
chip_gen: v6e
topology: v6e:2x2x1
jax: 0.10.0
libtpu: 0.0.40
codegen_flags: <defaults>
</compile_context>

<pallas_src>
import numpy as np

import jax
import jax.numpy as jnp
from jax.experimental import pallas as pl
from jax.experimental.pallas import tpu as pltpu


def _round_up(v, m):
    return (v + m - 1) // m * m


# ----------------------------------------------------------------------------
# Kernel: one grid step == one joint group.  All experts of the group are
# evaluated in an unrolled in-kernel loop; the winner-take-all argmin over the
# per-sample reconstruction MSE happens in-registers, so only the winning
# (mu, logvar, x_hat, expert_idx) are stored.
# ----------------------------------------------------------------------------
def make_group_kernel(mlp_layers, e_max, b_pad, f_pad, latent):
    n_param_tensors = 2 * (2 * mlp_layers + 2)   # enc + fused mu|logvar head + dec + out

    def kernel(e_cnt_ref, f_cnt_ref, x_ref, *refs):
        params = refs[:n_param_tensors]
        mu_ref, lv_ref, xhat_ref, idx_ref = refs[n_param_tensors:]

        it = iter(range(0, n_param_tensors, 2))

        def nxt():
            i = next(it)
            return params[i], params[i + 1]

        enc = [nxt() for _ in range(mlp_layers)]
        wml, bml = nxt()                              # fused mu|logvar head
        dec = [nxt() for _ in range(mlp_layers)]
        wout, bout = nxt()

        g = pl.program_id(0)
        n_experts = e_cnt_ref[g]                      # valid experts in this group
        n_feat = f_cnt_ref[g]                         # valid feature lanes (F_g)

        x = x_ref[0]                                  # (b_pad, f_pad) f32, loaded once
        x_bf = x.astype(jnp.bfloat16)
        lane = jax.lax.broadcasted_iota(jnp.int32, (b_pad, f_pad), 1)
        feat_mask = lane < n_feat
        inv_f = 1.0 / n_feat.astype(jnp.float32)

        best_loss = best_mu = best_lv = best_xh = best_idx = None
        for e in range(e_max):                        # unrolled; e_max is small & static
            # ---- encoder (bias add + ReLU fused in one VPU epilogue) ----
            h = x_bf
            for w, b in enc:
                h = jnp.maximum(
                    jnp.dot(h, w[0, e], preferred_element_type=jnp.float32) + b[0, e],
                    0.0).astype(jnp.bfloat16)
            ml = jnp.dot(h, wml[0, e], preferred_element_type=jnp.float32) + bml[0, e]
            mu = ml[:, :latent]
            lv = ml[:, latent:]
            # ---- decoder, z = mu (deterministic) ----
            hd = mu.astype(jnp.bfloat16)
            for w, b in dec:
                hd = jnp.maximum(
                    jnp.dot(hd, w[0, e], preferred_element_type=jnp.float32) + b[0, e],
                    0.0).astype(jnp.bfloat16)
            xh = jnp.dot(hd, wout[0, e], preferred_element_type=jnp.float32) + bout[0, e]

            # ---- per-sample MSE over the valid F_g lanes only ----
            diff = jnp.where(feat_mask, xh - x, 0.0)
            loss = jnp.sum(diff * diff, axis=-1, keepdims=True) * inv_f     # (b_pad, 1)
            loss = jnp.where(e < n_experts, loss, jnp.inf)                  # mask pad experts

            # ---- running winner-take-all (strict < keeps first winner on ties,
            #      matching torch.argmin) ----
            if e == 0:
                best_loss, best_mu, best_lv, best_xh = loss, mu, lv, xh
                best_idx = jnp.zeros((b_pad, 1), jnp.int32)
            else:
                better = loss < best_loss
                best_loss = jnp.where(better, loss, best_loss)
                best_mu = jnp.where(better, mu, best_mu)
                best_lv = jnp.where(better, lv, best_lv)
                best_xh = jnp.where(better, xh, best_xh)
                best_idx = jnp.where(better, jnp.int32(e), best_idx)

        mu_ref[0] = best_mu
        lv_ref[0] = best_lv
        xhat_ref[0] = best_xh
        idx_ref[0] = best_idx

    return kernel


# ----------------------------------------------------------------------------
# Parameter init (deterministic, synthetic) — same layout as the original:
# per-group list alternating W, b with a leading expert dim E, all float32.
# ----------------------------------------------------------------------------
def init_local_params(key, E, F, H, L, mlp_layers):
    n_tensors = 2 * (2 * mlp_layers + 3)
    keys = jax.random.split(key, n_tensors)
    ki = iter(range(n_tensors))

    def W(shape):
        return (0.1 * jax.random.normal(keys[next(ki)], shape)).astype(jnp.float32)

    params = []
    d_prev = F
    for _ in range(mlp_layers):               # encoder hidden
        params += [W((E, d_prev, H)), W((E, 1, H))]
        d_prev = H
    params += [W((E, H, L)), W((E, 1, L))]    # mu head
    params += [W((E, H, L)), W((E, 1, L))]    # logvar head
    d_prev = L
    for _ in range(mlp_layers):               # decoder hidden
        params += [W((E, d_prev, H)), W((E, 1, H))]
        d_prev = H
    params += [W((E, H, F)), W((E, 1, F))]    # reconstruction head
    return params


# ----------------------------------------------------------------------------
# Pack per-group/per-expert params into stacked (G, E_max, din, dout) tensors.
# Weight matrices -> bf16, biases stay f32.  mu/logvar heads fused to (H, 2L).
# F-dependent tensors are zero-padded to f_pad; expert dim zero-padded to e_max.
# ----------------------------------------------------------------------------
def pack_global_params(group_params, group_names, mlp_layers, e_max, f_pad):
    per_group = []
    for g in group_names:
        p = list(group_params[g])
        i = 0
        packed = []
        for l in range(mlp_layers):                        # encoder hidden layers
            w, b = p[i], p[i + 1]
            i += 2
            if l == 0:
                w = jnp.pad(w, ((0, 0), (0, f_pad - w.shape[1]), (0, 0)))
            packed += [w, b]
        wmu, bmu, wlv, blv = p[i], p[i + 1], p[i + 2], p[i + 3]
        i += 4
        packed += [jnp.concatenate([wmu, wlv], axis=-1),   # fused mu|logvar head
                   jnp.concatenate([bmu, blv], axis=-1)]
        for _ in range(mlp_layers):                        # decoder hidden layers
            packed += [p[i], p[i + 1]]
            i += 2
        wout, bout = p[i], p[i + 1]
        packed += [jnp.pad(wout, ((0, 0), (0, 0), (0, f_pad - wout.shape[2]))),
                   jnp.pad(bout, ((0, 0), (0, 0), (0, f_pad - bout.shape[2])))]
        packed = [jnp.pad(t, ((0, e_max - t.shape[0]),) + ((0, 0),) * (t.ndim - 1))
                  for t in packed]
        per_group.append(packed)

    stacked = []
    for ti in range(len(per_group[0])):
        t = jnp.stack([pg[ti] for pg in per_group], axis=0)
        if ti % 2 == 0:                                    # weight matrix -> bf16
            t = t.astype(jnp.bfloat16)
        stacked.append(t)
    return stacked


# ----------------------------------------------------------------------------
# GlobalmonopolyMoE.forward — one fused pallas_call over all groups.
# ----------------------------------------------------------------------------
def global_monopoly_moe_forward(x, group_params, group_joint_dict, mlp_layers):
    B, dT, N, d = x.shape
    group_names = list(group_joint_dict.keys())
    G = len(group_names)
    joints_per_group = [np.asarray(group_joint_dict[g], np.int32) for g in group_names]
    n_gs = [len(j) for j in joints_per_group]
    f_gs = [dT * n * d for n in n_gs]
    e_gs = [group_params[g][0].shape[0] for g in group_names]
    latent = group_params[group_names[0]][2 * mlp_layers].shape[-1]
    e_max = max(e_gs)
    f_pad = _round_up(max(f_gs), 128)        # lane-dense x / x_hat slabs
    b_pad = max(8, _round_up(B, 8))          # full sublanes on every vreg / MXU pass

    # -- single static joint gather, then per-group flatten + pad -------------
    all_joints = np.concatenate(joints_per_group)
    x_perm = x[:, :, all_joints, :]                       # one static-index gather
    xg_list, off = [], 0
    for n_g, f_g in zip(n_gs, f_gs):
        xf = x_perm[:, :, off:off + n_g, :].reshape(B, f_g)   # row-major == torch reshape
        xg_list.append(jnp.pad(xf, ((0, b_pad - B), (0, f_pad - f_g))))
        off += n_g
    xg = jnp.stack(xg_list, axis=0)                       # (G, b_pad, f_pad) f32

    flat_params = pack_global_params(group_params, group_names, mlp_layers, e_max, f_pad)
    e_cnt = jnp.asarray(e_gs, jnp.int32)
    f_cnt = jnp.asarray(f_gs, jnp.int32)

    in_specs = [pl.BlockSpec((1, b_pad, f_pad), lambda g, *_: (g, 0, 0))]
    for t in flat_params:
        in_specs.append(
            pl.BlockSpec((1,) + tuple(t.shape[1:]),
                         lambda g, *_, nd=t.ndim: (g,) + (0,) * (nd - 1)))

    out_shape = (
        jax.ShapeDtypeStruct((G, b_pad, latent), jnp.float32),
        jax.ShapeDtypeStruct((G, b_pad, latent), jnp.float32),
        jax.ShapeDtypeStruct((G, b_pad, f_pad), jnp.float32),
        jax.ShapeDtypeStruct((G, b_pad, 1), jnp.int32),
    )
    out_specs = (
        pl.BlockSpec((1, b_pad, latent), lambda g, *_: (g, 0, 0)),
        pl.BlockSpec((1, b_pad, latent), lambda g, *_: (g, 0, 0)),
        pl.BlockSpec((1, b_pad, f_pad), lambda g, *_: (g, 0, 0)),
        pl.BlockSpec((1, b_pad, 1), lambda g, *_: (g, 0, 0)),
    )

    kernel = make_group_kernel(mlp_layers, e_max, b_pad, f_pad, latent)
    mu_all, lv_all, xh_all, idx_all = pl.pallas_call(
        kernel,
        out_shape=out_shape,
        grid_spec=pltpu.PrefetchScalarGridSpec(
            num_scalar_prefetch=2,
            grid=(G,),
            in_specs=in_specs,
            out_specs=out_specs,
        ),
        compiler_params=pltpu.CompilerParams(
            # Groups write disjoint output blocks -> shard across v7x's 2 TCs.
            dimension_semantics=("parallel",)),
    )(e_cnt, f_cnt, xg, *flat_params)

    group_mu, group_logvar, group_expert_idx = {}, {}, {}
    xh_groups = []
    for gi, g in enumerate(group_names):
        group_mu[g] = mu_all[gi, :B]
        group_logvar[g] = lv_all[gi, :B]
        group_expert_idx[g] = idx_all[gi, :B, 0]
        xh_groups.append(xh_all[gi, :B, :f_gs[gi]].reshape(B, dT, n_gs[gi], d))

    # -- local_dict_to_global_xhat: single static inverse permutation when the
    #    groups cover every joint; otherwise a static-index scatter into zeros.
    if sorted(all_joints.tolist()) == list(range(N)):
        xh_cat = jnp.concatenate(xh_groups, axis=2)
        out_xhat = xh_cat[:, :, np.argsort(all_joints), :]
    else:
        out_xhat = jnp.zeros((B, dT, N, d), jnp.float32)
        for gi in range(G):
            out_xhat = out_xhat.at[:, :, joints_per_group[gi], :].set(xh_groups[gi])

    return group_mu, group_logvar, out_xhat, group_expert_idx


# ----------------------------------------------------------------------------
# Main
# ----------------------------------------------------------------------------
if __name__ == "__main__":
    # Small synthetic configuration consistent with the module's constructor.
    B = 2
    TIME_LEN_MERGE = 5          # must be odd
    D_IN = 4
    D_OUT = 8                   # latent dim
    HIDDEN = 32
    MLP_LAYERS = 2
    group_joint_dict = {
        "arm_R": [0, 1, 2],
        "leg_L": [3, 4, 5],
        "waist": [6, 7],
    }
    group_num_experts = {"arm_R": 3, "leg_L": 2, "waist": 2}
    N = sum(len(v) for v in group_joint_dict.values())    # joint_num = 8

    key = jax.random.PRNGKey(0)
    kx, kp = jax.random.split(key)
    x = jax.random.normal(kx, (B, TIME_LEN_MERGE, N, D_IN), dtype=jnp.float32)

    # Deterministic per-group expert parameters.
    group_params = {}
    pkeys = jax.random.split(kp, len(group_joint_dict))
    for gk, (g, joints) in zip(pkeys, group_joint_dict.items()):
        F = TIME_LEN_MERGE * len(joints) * D_IN
        group_params[g] = init_local_params(
            gk, group_num_experts[g], F, HIDDEN, D_OUT, MLP_LAYERS)

    group_mu, group_logvar, out_xhat, group_expert_idx = global_monopoly_moe_forward(
        x, group_params, group_joint_dict, MLP_LAYERS)

    jax.block_until_ready(out_xhat)
    for g in group_joint_dict:
        jax.block_until_ready(group_mu[g])
        jax.block_until_ready(group_logvar[g])
        jax.block_until_ready(group_expert_idx[g])

    assert out_xhat.shape == (B, TIME_LEN_MERGE, N, D_IN)
    assert group_mu["arm_R"].shape == (B, D_OUT)
    assert group_logvar["arm_R"].shape == (B, D_OUT)
    assert group_expert_idx["arm_R"].shape == (B,)
    print("KERNEL_OK")
</pallas_src>

<mosaic_0001>
module attributes {stable_mosaic.version = 11 : i64} {
  func.func @kernel(%arg0: i32, %arg1: memref<3xi32, #tpu.memory_space<smem>>, %arg2: memref<3xi32, #tpu.memory_space<smem>>, %arg3: memref<1x8x128xf32, #tpu.memory_space<vmem>>, %arg4: memref<1x3x128x32xbf16, #tpu.memory_space<vmem>>, %arg5: memref<1x3x1x32xf32, #tpu.memory_space<vmem>>, %arg6: memref<1x3x32x32xbf16, #tpu.memory_space<vmem>>, %arg7: memref<1x3x1x32xf32, #tpu.memory_space<vmem>>, %arg8: memref<1x3x32x16xbf16, #tpu.memory_space<vmem>>, %arg9: memref<1x3x1x16xf32, #tpu.memory_space<vmem>>, %arg10: memref<1x3x8x32xbf16, #tpu.memory_space<vmem>>, %arg11: memref<1x3x1x32xf32, #tpu.memory_space<vmem>>, %arg12: memref<1x3x32x32xbf16, #tpu.memory_space<vmem>>, %arg13: memref<1x3x1x32xf32, #tpu.memory_space<vmem>>, %arg14: memref<1x3x32x128xbf16, #tpu.memory_space<vmem>>, %arg15: memref<1x3x1x128xf32, #tpu.memory_space<vmem>>, %arg16: memref<1x8x8xf32, #tpu.memory_space<vmem>>, %arg17: memref<1x8x8xf32, #tpu.memory_space<vmem>>, %arg18: memref<1x8x128xf32, #tpu.memory_space<vmem>>, %arg19: memref<1x8x1xi32, #tpu.memory_space<vmem>>) attributes {dimension_semantics = [#tpu.dimension_semantics<parallel>], iteration_bounds = array<i64: 3>, scalar_prefetch = 2 : i64, scratch_operands = 0 : i64, tpu.core_type = #tpu.core_type<tc>, window_params = [{transform_indices = @transform_0, window_bounds = array<i64: 1, 8, 128>}, {transform_indices = @transform_1, window_bounds = array<i64: 1, 3, 128, 32>}, {transform_indices = @transform_2, window_bounds = array<i64: 1, 3, 1, 32>}, {transform_indices = @transform_3, window_bounds = array<i64: 1, 3, 32, 32>}, {transform_indices = @transform_4, window_bounds = array<i64: 1, 3, 1, 32>}, {transform_indices = @transform_5, window_bounds = array<i64: 1, 3, 32, 16>}, {transform_indices = @transform_6, window_bounds = array<i64: 1, 3, 1, 16>}, {transform_indices = @transform_7, window_bounds = array<i64: 1, 3, 8, 32>}, {transform_indices = @transform_8, window_bounds = array<i64: 1, 3, 1, 32>}, {transform_indices = @transform_9, window_bounds = array<i64: 1, 3, 32, 32>}, {transform_indices = @transform_10, window_bounds = array<i64: 1, 3, 1, 32>}, {transform_indices = @transform_11, window_bounds = array<i64: 1, 3, 32, 128>}, {transform_indices = @transform_12, window_bounds = array<i64: 1, 3, 1, 128>}, {transform_indices = @transform_13, window_bounds = array<i64: 1, 8, 8>}, {transform_indices = @transform_14, window_bounds = array<i64: 1, 8, 8>}, {transform_indices = @transform_15, window_bounds = array<i64: 1, 8, 128>}, {transform_indices = @transform_16, window_bounds = array<i64: 1, 8, 1>}]} {
    %0 = arith.index_cast %arg0 : i32 to index
    %1 = memref.load %arg1[%0] : memref<3xi32, #tpu.memory_space<smem>>
    %2 = arith.index_cast %arg0 : i32 to index
    %3 = memref.load %arg2[%2] : memref<3xi32, #tpu.memory_space<smem>>
    %c0 = arith.constant 0 : index
    %c0_0 = arith.constant 0 : index
    %c0_1 = arith.constant 0 : index
    %4 = vector.load %arg3[%c0, %c0_0, %c0_1] : memref<1x8x128xf32, #tpu.memory_space<vmem>>, vector<1x8x128xf32>
    %5 = vector.shape_cast %4 : vector<1x8x128xf32> to vector<8x128xf32>
    %6 = arith.truncf %5 : vector<8x128xf32> to vector<8x128xbf16>
    %7 = tpu.iota {dimensions = array<i32: 1>} : vector<8x128xi32>
    %8 = vector.broadcast %3 : i32 to vector<8x128xi32>
    %9 = arith.cmpi slt, %7, %8 : vector<8x128xi32>
    %10 = arith.sitofp %3 : i32 to f32
    %cst = arith.constant 1.000000e+00 : f32
    %11 = arith.divf %cst, %10 : f32
    %c0_2 = arith.constant 0 : index
    %c0_3 = arith.constant 0 : index
    %c0_4 = arith.constant 0 : index
    %c0_5 = arith.constant 0 : index
    %12 = vector.load %arg4[%c0_2, %c0_3, %c0_4, %c0_5] : memref<1x3x128x32xbf16, #tpu.memory_space<vmem>>, vector<1x1x128x32xbf16>
    %13 = vector.shape_cast %12 : vector<1x1x128x32xbf16> to vector<128x32xbf16>
    %cst_6 = arith.constant dense<0.000000e+00> : vector<8x32xf32>
    %14 = tpu.matmul %6, %13, %cst_6 {dimension_numbers = #tpu.dot_dimension_numbers<[1], [0], [0], [1], [0, 0, 1, 1], [], []>} : vector<8x128xbf16>, vector<128x32xbf16>, vector<8x32xf32> -> vector<8x32xf32>
    %c0_7 = arith.constant 0 : index
    %c0_8 = arith.constant 0 : index
    %c0_9 = arith.constant 0 : index
    %c0_10 = arith.constant 0 : index
    %15 = vector.load %arg5[%c0_7, %c0_8, %c0_9, %c0_10] : memref<1x3x1x32xf32, #tpu.memory_space<vmem>>, vector<1x1x1x32xf32>
    %16 = vector.shape_cast %15 : vector<1x1x1x32xf32> to vector<1x32xf32>
    %17 = vector.broadcast %16 : vector<1x32xf32> to vector<8x32xf32>
    %18 = arith.addf %14, %17 : vector<8x32xf32>
    %cst_11 = arith.constant 0.000000e+00 : f32
    %19 = vector.broadcast %cst_11 : f32 to vector<8x32xf32>
    %20 = arith.maximumf %18, %19 : vector<8x32xf32>
    %21 = arith.truncf %20 : vector<8x32xf32> to vector<8x32xbf16>
    %c0_12 = arith.constant 0 : index
    %c0_13 = arith.constant 0 : index
    %c0_14 = arith.constant 0 : index
    %c0_15 = arith.constant 0 : index
    %22 = vector.load %arg6[%c0_12, %c0_13, %c0_14, %c0_15] : memref<1x3x32x32xbf16, #tpu.memory_space<vmem>>, vector<1x1x32x32xbf16>
    %23 = vector.shape_cast %22 : vector<1x1x32x32xbf16> to vector<32x32xbf16>
    %cst_16 = arith.constant dense<0.000000e+00> : vector<8x32xf32>
    %24 = tpu.matmul %21, %23, %cst_16 {dimension_numbers = #tpu.dot_dimension_numbers<[1], [0], [0], [1], [0, 0, 1, 1], [], []>} : vector<8x32xbf16>, vector<32x32xbf16>, vector<8x32xf32> -> vector<8x32xf32>
    %c0_17 = arith.constant 0 : index
    %c0_18 = arith.constant 0 : index
    %c0_19 = arith.constant 0 : index
    %c0_20 = arith.constant 0 : index
    %25 = vector.load %arg7[%c0_17, %c0_18, %c0_19, %c0_20] : memref<1x3x1x32xf32, #tpu.memory_space<vmem>>, vector<1x1x1x32xf32>
    %26 = vector.shape_cast %25 : vector<1x1x1x32xf32> to vector<1x32xf32>
    %27 = vector.broadcast %26 : vector<1x32xf32> to vector<8x32xf32>
    %28 = arith.addf %24, %27 : vector<8x32xf32>
    %cst_21 = arith.constant 0.000000e+00 : f32
    %29 = vector.broadcast %cst_21 : f32 to vector<8x32xf32>
    %30 = arith.maximumf %28, %29 : vector<8x32xf32>
    %31 = arith.truncf %30 : vector<8x32xf32> to vector<8x32xbf16>
    %c0_22 = arith.constant 0 : index
    %c0_23 = arith.constant 0 : index
    %c0_24 = arith.constant 0 : index
    %c0_25 = arith.constant 0 : index
    %32 = vector.load %arg8[%c0_22, %c0_23, %c0_24, %c0_25] : memref<1x3x32x16xbf16, #tpu.memory_space<vmem>>, vector<1x1x32x16xbf16>
    %33 = vector.shape_cast %32 : vector<1x1x32x16xbf16> to vector<32x16xbf16>
    %cst_26 = arith.constant dense<0.000000e+00> : vector<8x16xf32>
    %34 = tpu.matmul %31, %33, %cst_26 {dimension_numbers = #tpu.dot_dimension_numbers<[1], [0], [0], [1], [0, 0, 1, 1], [], []>} : vector<8x32xbf16>, vector<32x16xbf16>, vector<8x16xf32> -> vector<8x16xf32>
    %c0_27 = arith.constant 0 : index
    %c0_28 = arith.constant 0 : index
    %c0_29 = arith.constant 0 : index
    %c0_30 = arith.constant 0 : index
    %35 = vector.load %arg9[%c0_27, %c0_28, %c0_29, %c0_30] : memref<1x3x1x16xf32, #tpu.memory_space<vmem>>, vector<1x1x1x16xf32>
    %36 = vector.shape_cast %35 : vector<1x1x1x16xf32> to vector<1x16xf32>
    %37 = vector.broadcast %36 : vector<1x16xf32> to vector<8x16xf32>
    %38 = arith.addf %34, %37 : vector<8x16xf32>
    %39 = vector.extract_strided_slice %38 {offsets = [0, 0], sizes = [8, 8], strides = [1, 1]} : vector<8x16xf32> to vector<8x8xf32>
    %40 = vector.extract_strided_slice %38 {offsets = [0, 8], sizes = [8, 8], strides = [1, 1]} : vector<8x16xf32> to vector<8x8xf32>
    %41 = arith.truncf %39 : vector<8x8xf32> to vector<8x8xbf16>
    %c0_31 = arith.constant 0 : index
    %c0_32 = arith.constant 0 : index
    %c0_33 = arith.constant 0 : index
    %c0_34 = arith.constant 0 : index
    %42 = vector.load %arg10[%c0_31, %c0_32, %c0_33, %c0_34] : memref<1x3x8x32xbf16, #tpu.memory_space<vmem>>, vector<1x1x8x32xbf16>
    %43 = vector.shape_cast %42 : vector<1x1x8x32xbf16> to vector<8x32xbf16>
    %cst_35 = arith.constant dense<0.000000e+00> : vector<8x32xf32>
    %44 = tpu.matmul %41, %43, %cst_35 {dimension_numbers = #tpu.dot_dimension_numbers<[1], [0], [0], [1], [0, 0, 1, 1], [], []>} : vector<8x8xbf16>, vector<8x32xbf16>, vector<8x32xf32> -> vector<8x32xf32>
    %c0_36 = arith.constant 0 : index
    %c0_37 = arith.constant 0 : index
    %c0_38 = arith.constant 0 : index
    %c0_39 = arith.constant 0 : index
    %45 = vector.load %arg11[%c0_36, %c0_37, %c0_38, %c0_39] : memref<1x3x1x32xf32, #tpu.memory_space<vmem>>, vector<1x1x1x32xf32>
    %46 = vector.shape_cast %45 : vector<1x1x1x32xf32> to vector<1x32xf32>
    %47 = vector.broadcast %46 : vector<1x32xf32> to vector<8x32xf32>
    %48 = arith.addf %44, %47 : vector<8x32xf32>
    %cst_40 = arith.constant 0.000000e+00 : f32
    %49 = vector.broadcast %cst_40 : f32 to vector<8x32xf32>
    %50 = arith.maximumf %48, %49 : vector<8x32xf32>
    %51 = arith.truncf %50 : vector<8x32xf32> to vector<8x32xbf16>
    %c0_41 = arith.constant 0 : index
    %c0_42 = arith.constant 0 : index
    %c0_43 = arith.constant 0 : index
    %c0_44 = arith.constant 0 : index
    %52 = vector.load %arg12[%c0_41, %c0_42, %c0_43, %c0_44] : memref<1x3x32x32xbf16, #tpu.memory_space<vmem>>, vector<1x1x32x32xbf16>
    %53 = vector.shape_cast %52 : vector<1x1x32x32xbf16> to vector<32x32xbf16>
    %cst_45 = arith.constant dense<0.000000e+00> : vector<8x32xf32>
    %54 = tpu.matmul %51, %53, %cst_45 {dimension_numbers = #tpu.dot_dimension_numbers<[1], [0], [0], [1], [0, 0, 1, 1], [], []>} : vector<8x32xbf16>, vector<32x32xbf16>, vector<8x32xf32> -> vector<8x32xf32>
    %c0_46 = arith.constant 0 : index
    %c0_47 = arith.constant 0 : index
    %c0_48 = arith.constant 0 : index
    %c0_49 = arith.constant 0 : index
    %55 = vector.load %arg13[%c0_46, %c0_47, %c0_48, %c0_49] : memref<1x3x1x32xf32, #tpu.memory_space<vmem>>, vector<1x1x1x32xf32>
    %56 = vector.shape_cast %55 : vector<1x1x1x32xf32> to vector<1x32xf32>
    %57 = vector.broadcast %56 : vector<1x32xf32> to vector<8x32xf32>
    %58 = arith.addf %54, %57 : vector<8x32xf32>
    %cst_50 = arith.constant 0.000000e+00 : f32
    %59 = vector.broadcast %cst_50 : f32 to vector<8x32xf32>
    %60 = arith.maximumf %58, %59 : vector<8x32xf32>
    %61 = arith.truncf %60 : vector<8x32xf32> to vector<8x32xbf16>
    %c0_51 = arith.constant 0 : index
    %c0_52 = arith.constant 0 : index
    %c0_53 = arith.constant 0 : index
    %c0_54 = arith.constant 0 : index
    %62 = vector.load %arg14[%c0_51, %c0_52, %c0_53, %c0_54] : memref<1x3x32x128xbf16, #tpu.memory_space<vmem>>, vector<1x1x32x128xbf16>
    %63 = vector.shape_cast %62 : vector<1x1x32x128xbf16> to vector<32x128xbf16>
    %cst_55 = arith.constant dense<0.000000e+00> : vector<8x128xf32>
    %64 = tpu.matmul %61, %63, %cst_55 {dimension_numbers = #tpu.dot_dimension_numbers<[1], [0], [0], [1], [0, 0, 1, 1], [], []>} : vector<8x32xbf16>, vector<32x128xbf16>, vector<8x128xf32> -> vector<8x128xf32>
    %c0_56 = arith.constant 0 : index
    %c0_57 = arith.constant 0 : index
    %c0_58 = arith.constant 0 : index
    %c0_59 = arith.constant 0 : index
    %65 = vector.load %arg15[%c0_56, %c0_57, %c0_58, %c0_59] : memref<1x3x1x128xf32, #tpu.memory_space<vmem>>, vector<1x1x1x128xf32>
    %66 = vector.shape_cast %65 : vector<1x1x1x128xf32> to vector<1x128xf32>
    %67 = vector.broadcast %66 : vector<1x128xf32> to vector<8x128xf32>
    %68 = arith.addf %64, %67 : vector<8x128xf32>
    %69 = arith.subf %68, %5 : vector<8x128xf32>
    %cst_60 = arith.constant 0.000000e+00 : f32
    %70 = vector.broadcast %cst_60 : f32 to vector<8x128xf32>
    %71 = arith.select %9, %69, %70 : vector<8x128xi1>, vector<8x128xf32>
    %72 = arith.mulf %71, %71 : vector<8x128xf32>
    %cst_61 = arith.constant dense<0.000000e+00> : vector<8xf32>
    %73 = vector.multi_reduction <add>, %72, %cst_61 [1] : vector<8x128xf32> to vector<8xf32>
    %74 = vector.shape_cast %73 : vector<8xf32> to vector<8x1xf32>
    %75 = vector.broadcast %11 : f32 to vector<8x1xf32>
    %76 = arith.mulf %74, %75 : vector<8x1xf32>
    %c0_i32 = arith.constant 0 : i32
    %77 = arith.cmpi sgt, %1, %c0_i32 : i32
    %cst_62 = arith.constant 0x7F800000 : f32
    %78 = vector.broadcast %cst_62 : f32 to vector<8x1xf32>
    %79 = arith.select %77, %76, %78 : vector<8x1xf32>
    %c0_i32_63 = arith.constant 0 : i32
    %80 = vector.broadcast %c0_i32_63 : i32 to vector<8x1xi32>
    %c0_64 = arith.constant 0 : index
    %c1 = arith.constant 1 : index
    %c0_65 = arith.constant 0 : index
    %c0_66 = arith.constant 0 : index
    %81 = vector.load %arg4[%c0_64, %c1, %c0_65, %c0_66] : memref<1x3x128x32xbf16, #tpu.memory_space<vmem>>, vector<1x1x128x32xbf16>
    %82 = vector.shape_cast %81 : vector<1x1x128x32xbf16> to vector<128x32xbf16>
    %cst_67 = arith.constant dense<0.000000e+00> : vector<8x32xf32>
    %83 = tpu.matmul %6, %82, %cst_67 {dimension_numbers = #tpu.dot_dimension_numbers<[1], [0], [0], [1], [0, 0, 1, 1], [], []>} : vector<8x128xbf16>, vector<128x32xbf16>, vector<8x32xf32> -> vector<8x32xf32>
    %c0_68 = arith.constant 0 : index
    %c1_69 = arith.constant 1 : index
    %c0_70 = arith.constant 0 : index
    %c0_71 = arith.constant 0 : index
    %84 = vector.load %arg5[%c0_68, %c1_69, %c0_70, %c0_71] : memref<1x3x1x32xf32, #tpu.memory_space<vmem>>, vector<1x1x1x32xf32>
    %85 = vector.shape_cast %84 : vector<1x1x1x32xf32> to vector<1x32xf32>
    %86 = vector.broadcast %85 : vector<1x32xf32> to vector<8x32xf32>
    %87 = arith.addf %83, %86 : vector<8x32xf32>
    %cst_72 = arith.constant 0.000000e+00 : f32
    %88 = vector.broadcast %cst_72 : f32 to vector<8x32xf32>
    %89 = arith.maximumf %87, %88 : vector<8x32xf32>
    %90 = arith.truncf %89 : vector<8x32xf32> to vector<8x32xbf16>
    %c0_73 = arith.constant 0 : index
    %c1_74 = arith.constant 1 : index
    %c0_75 = arith.constant 0 : index
    %c0_76 = arith.constant 0 : index
    %91 = vector.load %arg6[%c0_73, %c1_74, %c0_75, %c0_76] : memref<1x3x32x32xbf16, #tpu.memory_space<vmem>>, vector<1x1x32x32xbf16>
    %92 = vector.shape_cast %91 : vector<1x1x32x32xbf16> to vector<32x32xbf16>
    %cst_77 = arith.constant dense<0.000000e+00> : vector<8x32xf32>
    %93 = tpu.matmul %90, %92, %cst_77 {dimension_numbers = #tpu.dot_dimension_numbers<[1], [0], [0], [1], [0, 0, 1, 1], [], []>} : vector<8x32xbf16>, vector<32x32xbf16>, vector<8x32xf32> -> vector<8x32xf32>
    %c0_78 = arith.constant 0 : index
    %c1_79 = arith.constant 1 : index
    %c0_80 = arith.constant 0 : index
    %c0_81 = arith.constant 0 : index
    %94 = vector.load %arg7[%c0_78, %c1_79, %c0_80, %c0_81] : memref<1x3x1x32xf32, #tpu.memory_space<vmem>>, vector<1x1x1x32xf32>
    %95 = vector.shape_cast %94 : vector<1x1x1x32xf32> to vector<1x32xf32>
    %96 = vector.broadcast %95 : vector<1x32xf32> to vector<8x32xf32>
    %97 = arith.addf %93, %96 : vector<8x32xf32>
    %cst_82 = arith.constant 0.000000e+00 : f32
    %98 = vector.broadcast %cst_82 : f32 to vector<8x32xf32>
    %99 = arith.maximumf %97, %98 : vector<8x32xf32>
    %100 = arith.truncf %99 : vector<8x32xf32> to vector<8x32xbf16>
    %c0_83 = arith.constant 0 : index
    %c1_84 = arith.constant 1 : index
    %c0_85 = arith.constant 0 : index
    %c0_86 = arith.constant 0 : index
    %101 = vector.load %arg8[%c0_83, %c1_84, %c0_85, %c0_86] : memref<1x3x32x16xbf16, #tpu.memory_space<vmem>>, vector<1x1x32x16xbf16>
    %102 = vector.shape_cast %101 : vector<1x1x32x16xbf16> to vector<32x16xbf16>
    %cst_87 = arith.constant dense<0.000000e+00> : vector<8x16xf32>
    %103 = tpu.matmul %100, %102, %cst_87 {dimension_numbers = #tpu.dot_dimension_numbers<[1], [0], [0], [1], [0, 0, 1, 1], [], []>} : vector<8x32xbf16>, vector<32x16xbf16>, vector<8x16xf32> -> vector<8x16xf32>
    %c0_88 = arith.constant 0 : index
    %c1_89 = arith.constant 1 : index
    %c0_90 = arith.constant 0 : index
    %c0_91 = arith.constant 0 : index
    %104 = vector.load %arg9[%c0_88, %c1_89, %c0_90, %c0_91] : memref<1x3x1x16xf32, #tpu.memory_space<vmem>>, vector<1x1x1x16xf32>
    %105 = vector.shape_cast %104 : vector<1x1x1x16xf32> to vector<1x16xf32>
    %106 = vector.broadcast %105 : vector<1x16xf32> to vector<8x16xf32>
    %107 = arith.addf %103, %106 : vector<8x16xf32>
    %108 = vector.extract_strided_slice %107 {offsets = [0, 0], sizes = [8, 8], strides = [1, 1]} : vector<8x16xf32> to vector<8x8xf32>
    %109 = vector.extract_strided_slice %107 {offsets = [0, 8], sizes = [8, 8], strides = [1, 1]} : vector<8x16xf32> to vector<8x8xf32>
    %110 = arith.truncf %108 : vector<8x8xf32> to vector<8x8xbf16>
    %c0_92 = arith.constant 0 : index
    %c1_93 = arith.constant 1 : index
    %c0_94 = arith.constant 0 : index
    %c0_95 = arith.constant 0 : index
    %111 = vector.load %arg10[%c0_92, %c1_93, %c0_94, %c0_95] : memref<1x3x8x32xbf16, #tpu.memory_space<vmem>>, vector<1x1x8x32xbf16>
    %112 = vector.shape_cast %111 : vector<1x1x8x32xbf16> to vector<8x32xbf16>
    %cst_96 = arith.constant dense<0.000000e+00> : vector<8x32xf32>
    %113 = tpu.matmul %110, %112, %cst_96 {dimension_numbers = #tpu.dot_dimension_numbers<[1], [0], [0], [1], [0, 0, 1, 1], [], []>} : vector<8x8xbf16>, vector<8x32xbf16>, vector<8x32xf32> -> vector<8x32xf32>
    %c0_97 = arith.constant 0 : index
    %c1_98 = arith.constant 1 : index
    %c0_99 = arith.constant 0 : index
    %c0_100 = arith.constant 0 : index
    %114 = vector.load %arg11[%c0_97, %c1_98, %c0_99, %c0_100] : memref<1x3x1x32xf32, #tpu.memory_space<vmem>>, vector<1x1x1x32xf32>
    %115 = vector.shape_cast %114 : vector<1x1x1x32xf32> to vector<1x32xf32>
    %116 = vector.broadcast %115 : vector<1x32xf32> to vector<8x32xf32>
    %117 = arith.addf %113, %116 : vector<8x32xf32>
    %cst_101 = arith.constant 0.000000e+00 : f32
    %118 = vector.broadcast %cst_101 : f32 to vector<8x32xf32>
    %119 = arith.maximumf %117, %118 : vector<8x32xf32>
    %120 = arith.truncf %119 : vector<8x32xf32> to vector<8x32xbf16>
    %c0_102 = arith.constant 0 : index
    %c1_103 = arith.constant 1 : index
    %c0_104 = arith.constant 0 : index
    %c0_105 = arith.constant 0 : index
    %121 = vector.load %arg12[%c0_102, %c1_103, %c0_104, %c0_105] : memref<1x3x32x32xbf16, #tpu.memory_space<vmem>>, vector<1x1x32x32xbf16>
    %122 = vector.shape_cast %121 : vector<1x1x32x32xbf16> to vector<32x32xbf16>
    %cst_106 = arith.constant dense<0.000000e+00> : vector<8x32xf32>
    %123 = tpu.matmul %120, %122, %cst_106 {dimension_numbers = #tpu.dot_dimension_numbers<[1], [0], [0], [1], [0, 0, 1, 1], [], []>} : vector<8x32xbf16>, vector<32x32xbf16>, vector<8x32xf32> -> vector<8x32xf32>
    %c0_107 = arith.constant 0 : index
    %c1_108 = arith.constant 1 : index
    %c0_109 = arith.constant 0 : index
    %c0_110 = arith.constant 0 : index
    %124 = vector.load %arg13[%c0_107, %c1_108, %c0_109, %c0_110] : memref<1x3x1x32xf32, #tpu.memory_space<vmem>>, vector<1x1x1x32xf32>
    %125 = vector.shape_cast %124 : vector<1x1x1x32xf32> to vector<1x32xf32>
    %126 = vector.broadcast %125 : vector<1x32xf32> to vector<8x32xf32>
    %127 = arith.addf %123, %126 : vector<8x32xf32>
    %cst_111 = arith.constant 0.000000e+00 : f32
    %128 = vector.broadcast %cst_111 : f32 to vector<8x32xf32>
    %129 = arith.maximumf %127, %128 : vector<8x32xf32>
    %130 = arith.truncf %129 : vector<8x32xf32> to vector<8x32xbf16>
    %c0_112 = arith.constant 0 : index
    %c1_113 = arith.constant 1 : index
    %c0_114 = arith.constant 0 : index
    %c0_115 = arith.constant 0 : index
    %131 = vector.load %arg14[%c0_112, %c1_113, %c0_114, %c0_115] : memref<1x3x32x128xbf16, #tpu.memory_space<vmem>>, vector<1x1x32x128xbf16>
    %132 = vector.shape_cast %131 : vector<1x1x32x128xbf16> to vector<32x128xbf16>
    %cst_116 = arith.constant dense<0.000000e+00> : vector<8x128xf32>
    %133 = tpu.matmul %130, %132, %cst_116 {dimension_numbers = #tpu.dot_dimension_numbers<[1], [0], [0], [1], [0, 0, 1, 1], [], []>} : vector<8x32xbf16>, vector<32x128xbf16>, vector<8x128xf32> -> vector<8x128xf32>
    %c0_117 = arith.constant 0 : index
    %c1_118 = arith.constant 1 : index
    %c0_119 = arith.constant 0 : index
    %c0_120 = arith.constant 0 : index
    %134 = vector.load %arg15[%c0_117, %c1_118, %c0_119, %c0_120] : memref<1x3x1x128xf32, #tpu.memory_space<vmem>>, vector<1x1x1x128xf32>
    %135 = vector.shape_cast %134 : vector<1x1x1x128xf32> to vector<1x128xf32>
    %136 = vector.broadcast %135 : vector<1x128xf32> to vector<8x128xf32>
    %137 = arith.addf %133, %136 : vector<8x128xf32>
    %138 = arith.subf %137, %5 : vector<8x128xf32>
    %cst_121 = arith.constant 0.000000e+00 : f32
    %139 = vector.broadcast %cst_121 : f32 to vector<8x128xf32>
    %140 = arith.select %9, %138, %139 : vector<8x128xi1>, vector<8x128xf32>
    %141 = arith.mulf %140, %140 : vector<8x128xf32>
    %cst_122 = arith.constant dense<0.000000e+00> : vector<8xf32>
    %142 = vector.multi_reduction <add>, %141, %cst_122 [1] : vector<8x128xf32> to vector<8xf32>
    %143 = vector.shape_cast %142 : vector<8xf32> to vector<8x1xf32>
    %144 = vector.broadcast %11 : f32 to vector<8x1xf32>
    %145 = arith.mulf %143, %144 : vector<8x1xf32>
    %c1_i32 = arith.constant 1 : i32
    %146 = arith.cmpi sgt, %1, %c1_i32 : i32
    %cst_123 = arith.constant 0x7F800000 : f32
    %147 = vector.broadcast %cst_123 : f32 to vector<8x1xf32>
    %148 = arith.select %146, %145, %147 : vector<8x1xf32>
    %149 = arith.cmpf olt, %148, %79 : vector<8x1xf32>
    %150 = arith.select %149, %148, %79 : vector<8x1xi1>, vector<8x1xf32>
    %151 = vector.shape_cast %149 : vector<8x1xi1> to vector<8x1xi1>
    %152 = vector.broadcast %151 : vector<8x1xi1> to vector<8x8xi1>
    %153 = arith.select %152, %108, %39 : vector<8x8xi1>, vector<8x8xf32>
    %154 = vector.shape_cast %149 : vector<8x1xi1> to vector<8x1xi1>
    %155 = vector.broadcast %154 : vector<8x1xi1> to vector<8x8xi1>
    %156 = arith.select %155, %109, %40 : vector<8x8xi1>, vector<8x8xf32>
    %157 = vector.shape_cast %149 : vector<8x1xi1> to vector<8x1xi1>
    %158 = vector.broadcast %157 : vector<8x1xi1> to vector<8x128xi1>
    %159 = arith.select %158, %137, %68 : vector<8x128xi1>, vector<8x128xf32>
    %c1_i32_124 = arith.constant 1 : i32
    %160 = vector.broadcast %c1_i32_124 : i32 to vector<8x1xi32>
    %161 = arith.select %149, %160, %80 : vector<8x1xi1>, vector<8x1xi32>
    %c0_125 = arith.constant 0 : index
    %c2 = arith.constant 2 : index
    %c0_126 = arith.constant 0 : index
    %c0_127 = arith.constant 0 : index
    %162 = vector.load %arg4[%c0_125, %c2, %c0_126, %c0_127] : memref<1x3x128x32xbf16, #tpu.memory_space<vmem>>, vector<1x1x128x32xbf16>
    %163 = vector.shape_cast %162 : vector<1x1x128x32xbf16> to vector<128x32xbf16>
    %cst_128 = arith.constant dense<0.000000e+00> : vector<8x32xf32>
    %164 = tpu.matmul %6, %163, %cst_128 {dimension_numbers = #tpu.dot_dimension_numbers<[1], [0], [0], [1], [0, 0, 1, 1], [], []>} : vector<8x128xbf16>, vector<128x32xbf16>, vector<8x32xf32> -> vector<8x32xf32>
    %c0_129 = arith.constant 0 : index
    %c2_130 = arith.constant 2 : index
    %c0_131 = arith.constant 0 : index
    %c0_132 = arith.constant 0 : index
    %165 = vector.load %arg5[%c0_129, %c2_130, %c0_131, %c0_132] : memref<1x3x1x32xf32, #tpu.memory_space<vmem>>, vector<1x1x1x32xf32>
    %166 = vector.shape_cast %165 : vector<1x1x1x32xf32> to vector<1x32xf32>
    %167 = vector.broadcast %166 : vector<1x32xf32> to vector<8x32xf32>
    %168 = arith.addf %164, %167 : vector<8x32xf32>
    %cst_133 = arith.constant 0.000000e+00 : f32
    %169 = vector.broadcast %cst_133 : f32 to vector<8x32xf32>
    %170 = arith.maximumf %168, %169 : vector<8x32xf32>
    %171 = arith.truncf %170 : vector<8x32xf32> to vector<8x32xbf16>
    %c0_134 = arith.constant 0 : index
    %c2_135 = arith.constant 2 : index
    %c0_136 = arith.constant 0 : index
    %c0_137 = arith.constant 0 : index
    %172 = vector.load %arg6[%c0_134, %c2_135, %c0_136, %c0_137] : memref<1x3x32x32xbf16, #tpu.memory_space<vmem>>, vector<1x1x32x32xbf16>
    %173 = vector.shape_cast %172 : vector<1x1x32x32xbf16> to vector<32x32xbf16>
    %cst_138 = arith.constant dense<0.000000e+00> : vector<8x32xf32>
    %174 = tpu.matmul %171, %173, %cst_138 {dimension_numbers = #tpu.dot_dimension_numbers<[1], [0], [0], [1], [0, 0, 1, 1], [], []>} : vector<8x32xbf16>, vector<32x32xbf16>, vector<8x32xf32> -> vector<8x32xf32>
    %c0_139 = arith.constant 0 : index
    %c2_140 = arith.constant 2 : index
    %c0_141 = arith.constant 0 : index
    %c0_142 = arith.constant 0 : index
    %175 = vector.load %arg7[%c0_139, %c2_140, %c0_141, %c0_142] : memref<1x3x1x32xf32, #tpu.memory_space<vmem>>, vector<1x1x1x32xf32>
    %176 = vector.shape_cast %175 : vector<1x1x1x32xf32> to vector<1x32xf32>
    %177 = vector.broadcast %176 : vector<1x32xf32> to vector<8x32xf32>
    %178 = arith.addf %174, %177 : vector<8x32xf32>
    %cst_143 = arith.constant 0.000000e+00 : f32
    %179 = vector.broadcast %cst_143 : f32 to vector<8x32xf32>
    %180 = arith.maximumf %178, %179 : vector<8x32xf32>
    %181 = arith.truncf %180 : vector<8x32xf32> to vector<8x32xbf16>
    %c0_144 = arith.constant 0 : index
    %c2_145 = arith.constant 2 : index
    %c0_146 = arith.constant 0 : index
    %c0_147 = arith.constant 0 : index
    %182 = vector.load %arg8[%c0_144, %c2_145, %c0_146, %c0_147] : memref<1x3x32x16xbf16, #tpu.memory_space<vmem>>, vector<1x1x32x16xbf16>
    %183 = vector.shape_cast %182 : vector<1x1x32x16xbf16> to vector<32x16xbf16>
    %cst_148 = arith.constant dense<0.000000e+00> : vector<8x16xf32>
    %184 = tpu.matmul %181, %183, %cst_148 {dimension_numbers = #tpu.dot_dimension_numbers<[1], [0], [0], [1], [0, 0, 1, 1], [], []>} : vector<8x32xbf16>, vector<32x16xbf16>, vector<8x16xf32> -> vector<8x16xf32>
    %c0_149 = arith.constant 0 : index
    %c2_150 = arith.constant 2 : index
    %c0_151 = arith.constant 0 : index
    %c0_152 = arith.constant 0 : index
    %185 = vector.load %arg9[%c0_149, %c2_150, %c0_151, %c0_152] : memref<1x3x1x16xf32, #tpu.memory_space<vmem>>, vector<1x1x1x16xf32>
    %186 = vector.shape_cast %185 : vector<1x1x1x16xf32> to vector<1x16xf32>
    %187 = vector.broadcast %186 : vector<1x16xf32> to vector<8x16xf32>
    %188 = arith.addf %184, %187 : vector<8x16xf32>
    %189 = vector.extract_strided_slice %188 {offsets = [0, 0], sizes = [8, 8], strides = [1, 1]} : vector<8x16xf32> to vector<8x8xf32>
    %190 = vector.extract_strided_slice %188 {offsets = [0, 8], sizes = [8, 8], strides = [1, 1]} : vector<8x16xf32> to vector<8x8xf32>
    %191 = arith.truncf %189 : vector<8x8xf32> to vector<8x8xbf16>
    %c0_153 = arith.constant 0 : index
    %c2_154 = arith.constant 2 : index
    %c0_155 = arith.constant 0 : index
    %c0_156 = arith.constant 0 : index
    %192 = vector.load %arg10[%c0_153, %c2_154, %c0_155, %c0_156] : memref<1x3x8x32xbf16, #tpu.memory_space<vmem>>, vector<1x1x8x32xbf16>
    %193 = vector.shape_cast %192 : vector<1x1x8x32xbf16> to vector<8x32xbf16>
    %cst_157 = arith.constant dense<0.000000e+00> : vector<8x32xf32>
    %194 = tpu.matmul %191, %193, %cst_157 {dimension_numbers = #tpu.dot_dimension_numbers<[1], [0], [0], [1], [0, 0, 1, 1], [], []>} : vector<8x8xbf16>, vector<8x32xbf16>, vector<8x32xf32> -> vector<8x32xf32>
    %c0_158 = arith.constant 0 : index
    %c2_159 = arith.constant 2 : index
    %c0_160 = arith.constant 0 : index
    %c0_161 = arith.constant 0 : index
    %195 = vector.load %arg11[%c0_158, %c2_159, %c0_160, %c0_161] : memref<1x3x1x32xf32, #tpu.memory_space<vmem>>, vector<1x1x1x32xf32>
    %196 = vector.shape_cast %195 : vector<1x1x1x32xf32> to vector<1x32xf32>
    %197 = vector.broadcast %196 : vector<1x32xf32> to vector<8x32xf32>
    %198 = arith.addf %194, %197 : vector<8x32xf32>
    %cst_162 = arith.constant 0.000000e+00 : f32
    %199 = vector.broadcast %cst_162 : f32 to vector<8x32xf32>
    %200 = arith.maximumf %198, %199 : vector<8x32xf32>
    %201 = arith.truncf %200 : vector<8x32xf32> to vector<8x32xbf16>
    %c0_163 = arith.constant 0 : index
    %c2_164 = arith.constant 2 : index
    %c0_165 = arith.constant 0 : index
    %c0_166 = arith.constant 0 : index
    %202 = vector.load %arg12[%c0_163, %c2_164, %c0_165, %c0_166] : memref<1x3x32x32xbf16, #tpu.memory_space<vmem>>, vector<1x1x32x32xbf16>
    %203 = vector.shape_cast %202 : vector<1x1x32x32xbf16> to vector<32x32xbf16>
    %cst_167 = arith.constant dense<0.000000e+00> : vector<8x32xf32>
    %204 = tpu.matmul %201, %203, %cst_167 {dimension_numbers = #tpu.dot_dimension_numbers<[1], [0], [0], [1], [0, 0, 1, 1], [], []>} : vector<8x32xbf16>, vector<32x32xbf16>, vector<8x32xf32> -> vector<8x32xf32>
    %c0_168 = arith.constant 0 : index
    %c2_169 = arith.constant 2 : index
    %c0_170 = arith.constant 0 : index
    %c0_171 = arith.constant 0 : index
    %205 = vector.load %arg13[%c0_168, %c2_169, %c0_170, %c0_171] : memref<1x3x1x32xf32, #tpu.memory_space<vmem>>, vector<1x1x1x32xf32>
    %206 = vector.shape_cast %205 : vector<1x1x1x32xf32> to vector<1x32xf32>
    %207 = vector.broadcast %206 : vector<1x32xf32> to vector<8x32xf32>
    %208 = arith.addf %204, %207 : vector<8x32xf32>
    %cst_172 = arith.constant 0.000000e+00 : f32
    %209 = vector.broadcast %cst_172 : f32 to vector<8x32xf32>
    %210 = arith.maximumf %208, %209 : vector<8x32xf32>
    %211 = arith.truncf %210 : vector<8x32xf32> to vector<8x32xbf16>
    %c0_173 = arith.constant 0 : index
    %c2_174 = arith.constant 2 : index
    %c0_175 = arith.constant 0 : index
    %c0_176 = arith.constant 0 : index
    %212 = vector.load %arg14[%c0_173, %c2_174, %c0_175, %c0_176] : memref<1x3x32x128xbf16, #tpu.memory_space<vmem>>, vector<1x1x32x128xbf16>
    %213 = vector.shape_cast %212 : vector<1x1x32x128xbf16> to vector<32x128xbf16>
    %cst_177 = arith.constant dense<0.000000e+00> : vector<8x128xf32>
    %214 = tpu.matmul %211, %213, %cst_177 {dimension_numbers = #tpu.dot_dimension_numbers<[1], [0], [0], [1], [0, 0, 1, 1], [], []>} : vector<8x32xbf16>, vector<32x128xbf16>, vector<8x128xf32> -> vector<8x128xf32>
    %c0_178 = arith.constant 0 : index
    %c2_179 = arith.constant 2 : index
    %c0_180 = arith.constant 0 : index
    %c0_181 = arith.constant 0 : index
    %215 = vector.load %arg15[%c0_178, %c2_179, %c0_180, %c0_181] : memref<1x3x1x128xf32, #tpu.memory_space<vmem>>, vector<1x1x1x128xf32>
    %216 = vector.shape_cast %215 : vector<1x1x1x128xf32> to vector<1x128xf32>
    %217 = vector.broadcast %216 : vector<1x128xf32> to vector<8x128xf32>
    %218 = arith.addf %214, %217 : vector<8x128xf32>
    %219 = arith.subf %218, %5 : vector<8x128xf32>
    %cst_182 = arith.constant 0.000000e+00 : f32
    %220 = vector.broadcast %cst_182 : f32 to vector<8x128xf32>
    %221 = arith.select %9, %219, %220 : vector<8x128xi1>, vector<8x128xf32>
    %222 = arith.mulf %221, %221 : vector<8x128xf32>
    %cst_183 = arith.constant dense<0.000000e+00> : vector<8xf32>
    %223 = vector.multi_reduction <add>, %222, %cst_183 [1] : vector<8x128xf32> to vector<8xf32>
    %224 = vector.shape_cast %223 : vector<8xf32> to vector<8x1xf32>
    %225 = vector.broadcast %11 : f32 to vector<8x1xf32>
    %226 = arith.mulf %224, %225 : vector<8x1xf32>
    %c2_i32 = arith.constant 2 : i32
    %227 = arith.cmpi sgt, %1, %c2_i32 : i32
    %cst_184 = arith.constant 0x7F800000 : f32
    %228 = vector.broadcast %cst_184 : f32 to vector<8x1xf32>
    %229 = arith.select %227, %226, %228 : vector<8x1xf32>
    %230 = arith.cmpf olt, %229, %150 : vector<8x1xf32>
    %231 = vector.shape_cast %230 : vector<8x1xi1> to vector<8x1xi1>
    %232 = vector.broadcast %231 : vector<8x1xi1> to vector<8x8xi1>
    %233 = arith.select %232, %189, %153 : vector<8x8xi1>, vector<8x8xf32>
    %234 = vector.shape_cast %230 : vector<8x1xi1> to vector<8x1xi1>
    %235 = vector.broadcast %234 : vector<8x1xi1> to vector<8x8xi1>
    %236 = arith.select %235, %190, %156 : vector<8x8xi1>, vector<8x8xf32>
    %237 = vector.shape_cast %230 : vector<8x1xi1> to vector<8x1xi1>
    %238 = vector.broadcast %237 : vector<8x1xi1> to vector<8x128xi1>
    %239 = arith.select %238, %218, %159 : vector<8x128xi1>, vector<8x128xf32>
    %c2_i32_185 = arith.constant 2 : i32
    %240 = vector.broadcast %c2_i32_185 : i32 to vector<8x1xi32>
    %241 = arith.select %230, %240, %161 : vector<8x1xi1>, vector<8x1xi32>
    %c0_186 = arith.constant 0 : index
    %c0_187 = arith.constant 0 : index
    %c0_188 = arith.constant 0 : index
    %242 = vector.load %arg16[%c0_186, %c0_187, %c0_188] : memref<1x8x8xf32, #tpu.memory_space<vmem>>, vector<1x8x8xf32>
    %243 = vector.shape_cast %242 : vector<1x8x8xf32> to vector<8x8xf32>
    %244 = vector.shape_cast %233 : vector<8x8xf32> to vector<1x8x8xf32>
    tpu.vector_store %arg16[%c0_186, %c0_187, %c0_188], %244 {strides = array<i32>} : memref<1x8x8xf32, #tpu.memory_space<vmem>>, vector<1x8x8xf32>,
    %c0_189 = arith.constant 0 : index
    %c0_190 = arith.constant 0 : index
    %c0_191 = arith.constant 0 : index
    %245 = vector.load %arg17[%c0_189, %c0_190, %c0_191] : memref<1x8x8xf32, #tpu.memory_space<vmem>>, vector<1x8x8xf32>
    %246 = vector.shape_cast %245 : vector<1x8x8xf32> to vector<8x8xf32>
    %247 = vector.shape_cast %236 : vector<8x8xf32> to vector<1x8x8xf32>
    tpu.vector_store %arg17[%c0_189, %c0_190, %c0_191], %247 {strides = array<i32>} : memref<1x8x8xf32, #tpu.memory_space<vmem>>, vector<1x8x8xf32>,
    %c0_192 = arith.constant 0 : index
    %c0_193 = arith.constant 0 : index
    %c0_194 = arith.constant 0 : index
    %248 = vector.load %arg18[%c0_192, %c0_193, %c0_194] : memref<1x8x128xf32, #tpu.memory_space<vmem>>, vector<1x8x128xf32>
    %249 = vector.shape_cast %248 : vector<1x8x128xf32> to vector<8x128xf32>
    %250 = vector.shape_cast %239 : vector<8x128xf32> to vector<1x8x128xf32>
    tpu.vector_store %arg18[%c0_192, %c0_193, %c0_194], %250 {strides = array<i32>} : memref<1x8x128xf32, #tpu.memory_space<vmem>>, vector<1x8x128xf32>,
    %c0_195 = arith.constant 0 : index
    %c0_196 = arith.constant 0 : index
    %c0_197 = arith.constant 0 : index
    %251 = vector.load %arg19[%c0_195, %c0_196, %c0_197] : memref<1x8x1xi32, #tpu.memory_space<vmem>>, vector<1x8x1xi32>
    %252 = vector.shape_cast %251 : vector<1x8x1xi32> to vector<8x1xi32>
    %253 = vector.shape_cast %241 : vector<8x1xi32> to vector<1x8x1xi32>
    tpu.vector_store %arg19[%c0_195, %c0_196, %c0_197], %253 {strides = array<i32>} : memref<1x8x1xi32, #tpu.memory_space<vmem>>, vector<1x8x1xi32>,
    return
  }
  func.func @transform_0(%arg0: i32, %arg1: memref<3xi32, #tpu.memory_space<smem>>, %arg2: memref<3xi32, #tpu.memory_space<smem>>) -> (i32, i32, i32) {
    %c0_i32 = arith.constant 0 : i32
    %c0_i32_0 = arith.constant 0 : i32
    %c0_i32_1 = arith.constant 0 : i32
    return %arg0, %c0_i32, %c0_i32_0 : i32, i32, i32
  }
  func.func @transform_1(%arg0: i32, %arg1: memref<3xi32, #tpu.memory_space<smem>>, %arg2: memref<3xi32, #tpu.memory_space<smem>>) -> (i32, i32, i32, i32) {
    %c0_i32 = arith.constant 0 : i32
    %c0_i32_0 = arith.constant 0 : i32
    %c0_i32_1 = arith.constant 0 : i32
    %c0_i32_2 = arith.constant 0 : i32
    return %arg0, %c0_i32, %c0_i32_0, %c0_i32_1 : i32, i32, i32, i32
  }
  func.func @transform_2(%arg0: i32, %arg1: memref<3xi32, #tpu.memory_space<smem>>, %arg2: memref<3xi32, #tpu.memory_space<smem>>) -> (i32, i32, i32, i32) {
    %c0_i32 = arith.constant 0 : i32
    %c0_i32_0 = arith.constant 0 : i32
    %c0_i32_1 = arith.constant 0 : i32
    %c0_i32_2 = arith.constant 0 : i32
    return %arg0, %c0_i32, %c0_i32_0, %c0_i32_1 : i32, i32, i32, i32
  }
  func.func @transform_3(%arg0: i32, %arg1: memref<3xi32, #tpu.memory_space<smem>>, %arg2: memref<3xi32, #tpu.memory_space<smem>>) -> (i32, i32, i32, i32) {
    %c0_i32 = arith.constant 0 : i32
    %c0_i32_0 = arith.constant 0 : i32
    %c0_i32_1 = arith.constant 0 : i32
    %c0_i32_2 = arith.constant 0 : i32
    return %arg0, %c0_i32, %c0_i32_0, %c0_i32_1 : i32, i32, i32, i32
  }
  func.func @transform_4(%arg0: i32, %arg1: memref<3xi32, #tpu.memory_space<smem>>, %arg2: memref<3xi32, #tpu.memory_space<smem>>) -> (i32, i32, i32, i32) {
    %c0_i32 = arith.constant 0 : i32
    %c0_i32_0 = arith.constant 0 : i32
    %c0_i32_1 = arith.constant 0 : i32
    %c0_i32_2 = arith.constant 0 : i32
    return %arg0, %c0_i32, %c0_i32_0, %c0_i32_1 : i32, i32, i32, i32
  }
  func.func @transform_5(%arg0: i32, %arg1: memref<3xi32, #tpu.memory_space<smem>>, %arg2: memref<3xi32, #tpu.memory_space<smem>>) -> (i32, i32, i32, i32) {
    %c0_i32 = arith.constant 0 : i32
    %c0_i32_0 = arith.constant 0 : i32
    %c0_i32_1 = arith.constant 0 : i32
    %c0_i32_2 = arith.constant 0 : i32
    return %arg0, %c0_i32, %c0_i32_0, %c0_i32_1 : i32, i32, i32, i32
  }
  func.func @transform_6(%arg0: i32, %arg1: memref<3xi32, #tpu.memory_space<smem>>, %arg2: memref<3xi32, #tpu.memory_space<smem>>) -> (i32, i32, i32, i32) {
    %c0_i32 = arith.constant 0 : i32
    %c0_i32_0 = arith.constant 0 : i32
    %c0_i32_1 = arith.constant 0 : i32
    %c0_i32_2 = arith.constant 0 : i32
    return %arg0, %c0_i32, %c0_i32_0, %c0_i32_1 : i32, i32, i32, i32
  }
  func.func @transform_7(%arg0: i32, %arg1: memref<3xi32, #tpu.memory_space<smem>>, %arg2: memref<3xi32, #tpu.memory_space<smem>>) -> (i32, i32, i32, i32) {
    %c0_i32 = arith.constant 0 : i32
    %c0_i32_0 = arith.constant 0 : i32
    %c0_i32_1 = arith.constant 0 : i32
    %c0_i32_2 = arith.constant 0 : i32
    return %arg0, %c0_i32, %c0_i32_0, %c0_i32_1 : i32, i32, i32, i32
  }
  func.func @transform_8(%arg0: i32, %arg1: memref<3xi32, #tpu.memory_space<smem>>, %arg2: memref<3xi32, #tpu.memory_space<smem>>) -> (i32, i32, i32, i32) {
    %c0_i32 = arith.constant 0 : i32
    %c0_i32_0 = arith.constant 0 : i32
    %c0_i32_1 = arith.constant 0 : i32
    %c0_i32_2 = arith.constant 0 : i32
    return %arg0, %c0_i32, %c0_i32_0, %c0_i32_1 : i32, i32, i32, i32
  }
  func.func @transform_9(%arg0: i32, %arg1: memref<3xi32, #tpu.memory_space<smem>>, %arg2: memref<3xi32, #tpu.memory_space<smem>>) -> (i32, i32, i32, i32) {
    %c0_i32 = arith.constant 0 : i32
    %c0_i32_0 = arith.constant 0 : i32
    %c0_i32_1 = arith.constant 0 : i32
    %c0_i32_2 = arith.constant 0 : i32
    return %arg0, %c0_i32, %c0_i32_0, %c0_i32_1 : i32, i32, i32, i32
  }
  func.func @transform_10(%arg0: i32, %arg1: memref<3xi32, #tpu.memory_space<smem>>, %arg2: memref<3xi32, #tpu.memory_space<smem>>) -> (i32, i32, i32, i32) {
    %c0_i32 = arith.constant 0 : i32
    %c0_i32_0 = arith.constant 0 : i32
    %c0_i32_1 = arith.constant 0 : i32
    %c0_i32_2 = arith.constant 0 : i32
    return %arg0, %c0_i32, %c0_i32_0, %c0_i32_1 : i32, i32, i32, i32
  }
  func.func @transform_11(%arg0: i32, %arg1: memref<3xi32, #tpu.memory_space<smem>>, %arg2: memref<3xi32, #tpu.memory_space<smem>>) -> (i32, i32, i32, i32) {
    %c0_i32 = arith.constant 0 : i32
    %c0_i32_0 = arith.constant 0 : i32
    %c0_i32_1 = arith.constant 0 : i32
    %c0_i32_2 = arith.constant 0 : i32
    return %arg0, %c0_i32, %c0_i32_0, %c0_i32_1 : i32, i32, i32, i32
  }
  func.func @transform_12(%arg0: i32, %arg1: memref<3xi32, #tpu.memory_space<smem>>, %arg2: memref<3xi32, #tpu.memory_space<smem>>) -> (i32, i32, i32, i32) {
    %c0_i32 = arith.constant 0 : i32
    %c0_i32_0 = arith.constant 0 : i32
    %c0_i32_1 = arith.constant 0 : i32
    %c0_i32_2 = arith.constant 0 : i32
    return %arg0, %c0_i32, %c0_i32_0, %c0_i32_1 : i32, i32, i32, i32
  }
  func.func @transform_13(%arg0: i32, %arg1: memref<3xi32, #tpu.memory_space<smem>>, %arg2: memref<3xi32, #tpu.memory_space<smem>>) -> (i32, i32, i32) {
    %c0_i32 = arith.constant 0 : i32
    %c0_i32_0 = arith.constant 0 : i32
    %c0_i32_1 = arith.constant 0 : i32
    return %arg0, %c0_i32, %c0_i32_0 : i32, i32, i32
  }
  func.func @transform_14(%arg0: i32, %arg1: memref<3xi32, #tpu.memory_space<smem>>, %arg2: memref<3xi32, #tpu.memory_space<smem>>) -> (i32, i32, i32) {
    %c0_i32 = arith.constant 0 : i32
    %c0_i32_0 = arith.constant 0 : i32
    %c0_i32_1 = arith.constant 0 : i32
    return %arg0, %c0_i32, %c0_i32_0 : i32, i32, i32
  }
  func.func @transform_15(%arg0: i32, %arg1: memref<3xi32, #tpu.memory_space<smem>>, %arg2: memref<3xi32, #tpu.memory_space<smem>>) -> (i32, i32, i32) {
    %c0_i32 = arith.constant 0 : i32
    %c0_i32_0 = arith.constant 0 : i32
    %c0_i32_1 = arith.constant 0 : i32
    return %arg0, %c0_i32, %c0_i32_0 : i32, i32, i32
  }
  func.func @transform_16(%arg0: i32, %arg1: memref<3xi32, #tpu.memory_space<smem>>, %arg2: memref<3xi32, #tpu.memory_space<smem>>) -> (i32, i32, i32) {
    %c0_i32 = arith.constant 0 : i32
    %c0_i32_0 = arith.constant 0 : i32
    %c0_i32_1 = arith.constant 0 : i32
    return %arg0, %c0_i32, %c0_i32_0 : i32, i32, i32
  }
}

</mosaic_0001>

<llo_original>
// kernel: tpu_custom_call.1
$region0: #{tpu_custom_call.1}
  #allocation0 [shape = 'u32[]', space=smem, size = 0x4, offset = 0x4, fixed_abs, tag = 'smem constant byte address 0x4 - core index']
  #allocation1 [shape = 'u32[144,128]{1,0:T(1,128)}', space=vmem, size = 0x12000, scoped, tag = 'internal scratch']
  #allocation2 [shape = 's32[1]{0}', space=sflag, size = 0x4, scoped, tag = 'scoped memory for tpu_custom_call.1']
  #allocation3 [shape = 'u8[512]{0}', space=smem, size = 0x200, scoped, tag = 'prefetched SMEM operand 0']
  #allocation4 [shape = 'u8[512]{0}', space=smem, size = 0x200, scoped, tag = 'prefetched SMEM operand 1']
  %s0 = inlined_call_operand.vmem [shape: s32[3], index: 0, kind: input, shape index: {}]
  %s1 = inlined_call_operand.vmem [shape: s32[3], index: 1, kind: input, shape index: {}]
  %s2 = inlined_call_operand.vmem [shape: f32[3,8,128], index: 2, kind: input, shape index: {}]
  %s3 = inlined_call_operand.vmem [shape: bf16[3,3,128,32], index: 3, kind: input, shape index: {}]
  %s4 = inlined_call_operand.vmem [shape: f32[3,3,1,32], index: 4, kind: input, shape index: {}]
  %s5 = inlined_call_operand.vmem [shape: bf16[3,3,32,32], index: 5, kind: input, shape index: {}]
  %s6 = inlined_call_operand.vmem [shape: f32[3,3,1,32], index: 6, kind: input, shape index: {}]
  %s7 = inlined_call_operand.vmem [shape: bf16[3,3,32,16], index: 7, kind: input, shape index: {}]
  %s8 = inlined_call_operand.vmem [shape: f32[3,3,1,16], index: 8, kind: input, shape index: {}]
  %s9 = inlined_call_operand.vmem [shape: bf16[3,3,8,32], index: 9, kind: input, shape index: {}]
  %s10 = inlined_call_operand.vmem [shape: f32[3,3,1,32], index: 10, kind: input, shape index: {}]
  %s11 = inlined_call_operand.vmem [shape: bf16[3,3,32,32], index: 11, kind: input, shape index: {}]
  %s12 = inlined_call_operand.vmem [shape: f32[3,3,1,32], index: 12, kind: input, shape index: {}]
  %s13 = inlined_call_operand.vmem [shape: bf16[3,3,32,128], index: 13, kind: input, shape index: {}]
  %s14 = inlined_call_operand.vmem [shape: f32[3,3,1,128], index: 14, kind: input, shape index: {}]
  %s15 = inlined_call_operand.hbm [shape: f32[3,8,8], index: 15, kind: output, shape index: {0}]
  %s16 = inlined_call_operand.hbm [shape: f32[3,8,8], index: 16, kind: output, shape index: {1}]
  %s17 = inlined_call_operand.hbm [shape: f32[3,8,128], index: 17, kind: output, shape index: {2}]
  %s18 = inlined_call_operand.vmem [shape: s32[3,8,1], index: 18, kind: output, shape index: {3}]
  %19 = xla_tuple %s15, %s16, %s17, %s18
  %s20 = sld [smem:[#allocation0]]
  $region109: #{tpu_custom_call.1} parent=0
    _
  %s22 = ssub.s32 1, %s20
  %s23 = scalar_select 0, %s22, %s20
  %s24 = sshll.u32 %s0, 4
  %s25 = int_to_ptr.vmem [resolvable:$true] %s24
  %27 = dma.vmem_to_smem %s25, 16, [#allocation3], [#allocation2]
  %s28 = sshll.u32 %s1, 4
  %s29 = int_to_ptr.vmem [resolvable:$true] %s28
  %31 = dma.vmem_to_smem %s29, 16, [#allocation4], [#allocation2]
  %32 = dma.done [#allocation2], 32
  %33 = sfence
  $region1: #{tpu_custom_call.1} parent=0
    #allocation5 [shape = 'u8[8192]{0}', space=vmem, size = 0x2000, scoped, tag = 'output window, operand 0']
    #allocation6 [shape = 's32[2]{0}', space=sflag, size = 0x8, scoped, tag = 'scoped memory for tpu_custom_call.1']
    #allocation7 [shape = 'u8[8192]{0}', space=vmem, size = 0x2000, scoped, tag = 'output window, operand 1']
    #allocation8 [shape = 's32[2]{0}', space=sflag, size = 0x8, scoped, tag = 'scoped memory for tpu_custom_call.1']
    #allocation9 [shape = 'u8[8192]{0}', space=vmem, size = 0x2000, scoped, tag = 'output window, operand 2']
    %34 = vsyncpa [#allocation6], 0
    %s35 = scalar_lea.sflag [#allocation6], 1
    %36 = vsyncpa %s35, 0
    %37 = vsyncpa [#allocation8], 0
    %s38 = scalar_lea.sflag [#allocation8], 1
    %39 = vsyncpa %s38, 0
    loop: start=0, step=1, limit=5
    $region2: #{tpu_custom_call.1} parent=1 // loop_pre_header
      _
    $region3: #{tpu_custom_call.1} parent=1 // loop_header
      %s41 = sphi 0, %s45
      %p42 = scmp.ge.s32.totalorder %s41, 5
      %s51 = sphi 0, %s53
      %s54 = sphi 0, %s51
      %s55 = sphi 0, %s54
      %s71 = sphi 0, %s55
      %s77 = sphi 0, %s79
      %s80 = sphi 0, %s77
      %s81 = sphi 0, %s80
      %s97 = sphi 0, %s81
      %s103 = sphi 0, %s105
      %s106 = sphi 0, %s103
      %s107 = sphi 0, %s106
      %s123 = sphi 0, %s107
      %s129 = sphi 0, %s131
      %s132 = sphi 0, %s129
      %s133 = sphi 0, %s132
      %s149 = sphi 0, %s133
      %s155 = sphi 0, %s157
      %s158 = sphi 0, %s155
      %s159 = sphi 0, %s158
      %s175 = sphi 0, %s159
      %s181 = sphi 0, %s183
      %s184 = sphi 0, %s181
      %s185 = sphi 0, %s184
      %s201 = sphi 0, %s185
      %s207 = sphi 0, %s209
      %s210 = sphi 0, %s207
      %s211 = sphi 0, %s210
      %s227 = sphi 0, %s211
      %s233 = sphi 0, %s235
      %s236 = sphi 0, %s233
      %s237 = sphi 0, %s236
      %s253 = sphi 0, %s237
      %s259 = sphi 0, %s261
      %s262 = sphi 0, %s259
      %s263 = sphi 0, %s262
      %s279 = sphi 0, %s263
      %s285 = sphi 0, %s287
      %s288 = sphi 0, %s285
      %s289 = sphi 0, %s288
      %s305 = sphi 0, %s289
      %s311 = sphi 0, %s313
      %s314 = sphi 0, %s311
      %s315 = sphi 0, %s314
      %s331 = sphi 0, %s315
      %s337 = sphi 0, %s339
      %s340 = sphi 0, %s337
      %s341 = sphi 0, %s340
      %s357 = sphi 0, %s341
      %s363 = sphi 0, %s365
      %s366 = sphi 0, %s363
      %s367 = sphi 0, %s366
      %s383 = sphi 0, %s367
      %s389 = sphi 0, %s391
      %s392 = sphi 0, %s389
      %s393 = sphi 0, %s392
      %s409 = sphi 0, %s393
      %s415 = sphi 0, %s417
      %s418 = sphi 0, %s415
      %s419 = sphi 0, %s418
      %s435 = sphi 0, %s419
      %s441 = sphi 0, %s443
      %s444 = sphi 0, %s441
      %s445 = sphi 0, %s444
      %s461 = sphi 0, %s445
      %s467 = sphi 0, %s469
      %s470 = sphi 0, %s467
      %s471 = sphi 0, %s470
      %s487 = sphi 0, %s471
    $region4: #{tpu_custom_call.1} parent=1 // loop_header_branch
      %44 = sbr.rel (%p42) target = $region8
    $region5: #{tpu_custom_call.1} parent=1 // loop_body
      %s46 = ssub.s32 %s41, 1
      %s47 = ssub.s32 %s41, 2
      %s48 = sadd.s32 %s41, 1
      %s49 = ssub.s32 %s41, %s48
      %p50 = scmp.eq.s32.totalorder %s49, 0
      %s52 = sadd.s32 %s51, 1
      %s53 = scalar_select %p50, %s51, %s52
      %p56 = pneg %p50
      %p57 = scmp.eq.s32.totalorder %s41, 2
      %p58 = por %p56, %p57
      %p59 = scmp.ne.s32.totalorder %s51, %s54
      %p60 = scmp.eq.s32.totalorder %s41, 0
      %p61 = por %p59, %p60
      %p62 = scmp.ne.s32.totalorder %s51, %s54
      %p63 = scmp.eq.s32.totalorder %s46, 2
      %p64 = por %p62, %p63
      %p65 = scmp.ne.s32.totalorder %s54, %s55
      %p66 = scmp.eq.s32.totalorder %s46, 0
      %p67 = por %p65, %p66
      %p68 = scmp.ne.s32.totalorder %s54, %s55
      %p69 = scmp.eq.s32.totalorder %s47, 2
      %p70 = por %p68, %p69
      %p72 = scmp.ne.s32.totalorder %s55, %s71
      %p73 = scmp.eq.s32.totalorder %s47, 0
      %p74 = por %p72, %p73
      %s75 = ssub.s32 %s41, %s48
      %p76 = scmp.eq.s32.totalorder %s75, 0
      %s78 = sadd.s32 %s77, 1
      %s79 = scalar_select %p76, %s77, %s78
      %p82 = pneg %p76
      %p83 = scmp.eq.s32.totalorder %s41, 2
      %p84 = por %p82, %p83
      %p85 = scmp.ne.s32.totalorder %s77, %s80
      %p86 = scmp.eq.s32.totalorder %s41, 0
      %p87 = por %p85, %p86
      %p88 = scmp.ne.s32.totalorder %s77, %s80
      %p89 = scmp.eq.s32.totalorder %s46, 2
      %p90 = por %p88, %p89
      %p91 = scmp.ne.s32.totalorder %s80, %s81
      %p92 = scmp.eq.s32.totalorder %s46, 0
      %p93 = por %p91, %p92
      %p94 = scmp.ne.s32.totalorder %s80, %s81
      %p95 = scmp.eq.s32.totalorder %s47, 2
      %p96 = por %p94, %p95
      %p98 = scmp.ne.s32.totalorder %s81, %s97
      %p99 = scmp.eq.s32.totalorder %s47, 0
      %p100 = por %p98, %p99
      %s101 = ssub.s32 %s41, %s48
      %p102 = scmp.eq.s32.totalorder %s101, 0
      %s104 = sadd.s32 %s103, 1
      %s105 = scalar_select %p102, %s103, %s104
      %p108 = pneg %p102
      %p109 = scmp.eq.s32.totalorder %s41, 2
      %p110 = por %p108, %p109
      %p111 = scmp.ne.s32.totalorder %s103, %s106
      %p112 = scmp.eq.s32.totalorder %s41, 0
      %p113 = por %p111, %p112
      %p114 = scmp.ne.s32.totalorder %s103, %s106
      %p115 = scmp.eq.s32.totalorder %s46, 2
      %p116 = por %p114, %p115
      %p117 = scmp.ne.s32.totalorder %s106, %s107
      %p118 = scmp.eq.s32.totalorder %s46, 0
      %p119 = por %p117, %p118
      %p120 = scmp.ne.s32.totalorder %s106, %s107
      %p121 = scmp.eq.s32.totalorder %s47, 2
      %p122 = por %p120, %p121
      %p124 = scmp.ne.s32.totalorder %s107, %s123
      %p125 = scmp.eq.s32.totalorder %s47, 0
      %p126 = por %p124, %p125
      %s127 = ssub.s32 %s41, %s48
      %p128 = scmp.eq.s32.totalorder %s127, 0
      %s130 = sadd.s32 %s129, 1
      %s131 = scalar_select %p128, %s129, %s130
      %p134 = pneg %p128
      %p135 = scmp.eq.s32.totalorder %s41, 2
      %p136 = por %p134, %p135
      %p137 = scmp.ne.s32.totalorder %s129, %s132
      %p138 = scmp.eq.s32.totalorder %s41, 0
      %p139 = por %p137, %p138
      %p140 = scmp.ne.s32.totalorder %s129, %s132
      %p141 = scmp.eq.s32.totalorder %s46, 2
      %p142 = por %p140, %p141
      %p143 = scmp.ne.s32.totalorder %s132, %s133
      %p144 = scmp.eq.s32.totalorder %s46, 0
      %p145 = por %p143, %p144
      %p146 = scmp.ne.s32.totalorder %s132, %s133
      %p147 = scmp.eq.s32.totalorder %s47, 2
      %p148 = por %p146, %p147
      %p150 = scmp.ne.s32.totalorder %s133, %s149
      %p151 = scmp.eq.s32.totalorder %s47, 0
      %p152 = por %p150, %p151
      %s153 = ssub.s32 %s41, %s48
      %p154 = scmp.eq.s32.totalorder %s153, 0
      %s156 = sadd.s32 %s155, 1
      %s157 = scalar_select %p154, %s155, %s156
      %p160 = pneg %p154
      %p161 = scmp.eq.s32.totalorder %s41, 2
      %p162 = por %p160, %p161
      %p163 = scmp.ne.s32.totalorder %s155, %s158
      %p164 = scmp.eq.s32.totalorder %s41, 0
      %p165 = por %p163, %p164
      %p166 = scmp.ne.s32.totalorder %s155, %s158
      %p167 = scmp.eq.s32.totalorder %s46, 2
      %p168 = por %p166, %p167
      %p169 = scmp.ne.s32.totalorder %s158, %s159
      %p170 = scmp.eq.s32.totalorder %s46, 0
      %p171 = por %p169, %p170
      %p172 = scmp.ne.s32.totalorder %s158, %s159
      %p173 = scmp.eq.s32.totalorder %s47, 2
      %p174 = por %p172, %p173
      %p176 = scmp.ne.s32.totalorder %s159, %s175
      %p177 = scmp.eq.s32.totalorder %s47, 0
      %p178 = por %p176, %p177
      %s179 = ssub.s32 %s41, %s48
      %p180 = scmp.eq.s32.totalorder %s179, 0
      %s182 = sadd.s32 %s181, 1
      %s183 = scalar_select %p180, %s181, %s182
      %p186 = pneg %p180
      %p187 = scmp.eq.s32.totalorder %s41, 2
      %p188 = por %p186, %p187
      %p189 = scmp.ne.s32.totalorder %s181, %s184
      %p190 = scmp.eq.s32.totalorder %s41, 0
      %p191 = por %p189, %p190
      %p192 = scmp.ne.s32.totalorder %s181, %s184
      %p193 = scmp.eq.s32.totalorder %s46, 2
      %p194 = por %p192, %p193
      %p195 = scmp.ne.s32.totalorder %s184, %s185
      %p196 = scmp.eq.s32.totalorder %s46, 0
      %p197 = por %p195, %p196
      %p198 = scmp.ne.s32.totalorder %s184, %s185
      %p199 = scmp.eq.s32.totalorder %s47, 2
      %p200 = por %p198, %p199
      %p202 = scmp.ne.s32.totalorder %s185, %s201
      %p203 = scmp.eq.s32.totalorder %s47, 0
      %p204 = por %p202, %p203
      %s205 = ssub.s32 %s41, %s48
      %p206 = scmp.eq.s32.totalorder %s205, 0
      %s208 = sadd.s32 %s207, 1
      %s209 = scalar_select %p206, %s207, %s208
      %p212 = pneg %p206
      %p213 = scmp.eq.s32.totalorder %s41, 2
      %p214 = por %p212, %p213
      %p215 = scmp.ne.s32.totalorder %s207, %s210
      %p216 = scmp.eq.s32.totalorder %s41, 0
      %p217 = por %p215, %p216
      %p218 = scmp.ne.s32.totalorder %s207, %s210
      %p219 = scmp.eq.s32.totalorder %s46, 2
      %p220 = por %p218, %p219
      %p221 = scmp.ne.s32.totalorder %s210, %s211
      %p222 = scmp.eq.s32.totalorder %s46, 0
      %p223 = por %p221, %p222
      %p224 = scmp.ne.s32.totalorder %s210, %s211
      %p225 = scmp.eq.s32.totalorder %s47, 2
      %p226 = por %p224, %p225
      %p228 = scmp.ne.s32.totalorder %s211, %s227
      %p229 = scmp.eq.s32.totalorder %s47, 0
      %p230 = por %p228, %p229
      %s231 = ssub.s32 %s41, %s48
      %p232 = scmp.eq.s32.totalorder %s231, 0
      %s234 = sadd.s32 %s233, 1
      %s235 = scalar_select %p232, %s233, %s234
      %p238 = pneg %p232
      %p239 = scmp.eq.s32.totalorder %s41, 2
      %p240 = por %p238, %p239
      %p241 = scmp.ne.s32.totalorder %s233, %s236
      %p242 = scmp.eq.s32.totalorder %s41, 0
      %p243 = por %p241, %p242
      %p244 = scmp.ne.s32.totalorder %s233, %s236
      %p245 = scmp.eq.s32.totalorder %s46, 2
      %p246 = por %p244, %p245
      %p247 = scmp.ne.s32.totalorder %s236, %s237
      %p248 = scmp.eq.s32.totalorder %s46, 0
      %p249 = por %p247, %p248
      %p250 = scmp.ne.s32.totalorder %s236, %s237
      %p251 = scmp.eq.s32.totalorder %s47, 2
      %p252 = por %p250, %p251
      %p254 = scmp.ne.s32.totalorder %s237, %s253
      %p255 = scmp.eq.s32.totalorder %s47, 0
      %p256 = por %p254, %p255
      %s257 = ssub.s32 %s41, %s48
      %p258 = scmp.eq.s32.totalorder %s257, 0
      %s260 = sadd.s32 %s259, 1
      %s261 = scalar_select %p258, %s259, %s260
      %p264 = pneg %p258
      %p265 = scmp.eq.s32.totalorder %s41, 2
      %p266 = por %p264, %p265
      %p267 = scmp.ne.s32.totalorder %s259, %s262
      %p268 = scmp.eq.s32.totalorder %s41, 0
      %p269 = por %p267, %p268
      %p270 = scmp.ne.s32.totalorder %s259, %s262
      %p271 = scmp.eq.s32.totalorder %s46, 2
      %p272 = por %p270, %p271
      %p273 = scmp.ne.s32.totalorder %s262, %s263
      %p274 = scmp.eq.s32.totalorder %s46, 0
      %p275 = por %p273, %p274
      %p276 = scmp.ne.s32.totalorder %s262, %s263
      %p277 = scmp.eq.s32.totalorder %s47, 2
      %p278 = por %p276, %p277
      %p280 = scmp.ne.s32.totalorder %s263, %s279
      %p281 = scmp.eq.s32.totalorder %s47, 0
      %p282 = por %p280, %p281
      %s283 = ssub.s32 %s41, %s48
      %p284 = scmp.eq.s32.totalorder %s283, 0
      %s286 = sadd.s32 %s285, 1
      %s287 = scalar_select %p284, %s285, %s286
      %p290 = pneg %p284
      %p291 = scmp.eq.s32.totalorder %s41, 2
      %p292 = por %p290, %p291
      %p293 = scmp.ne.s32.totalorder %s285, %s288
      %p294 = scmp.eq.s32.totalorder %s41, 0
      %p295 = por %p293, %p294
      %p296 = scmp.ne.s32.totalorder %s285, %s288
      %p297 = scmp.eq.s32.totalorder %s46, 2
      %p298 = por %p296, %p297
      %p299 = scmp.ne.s32.totalorder %s288, %s289
      %p300 = scmp.eq.s32.totalorder %s46, 0
      %p301 = por %p299, %p300
      %p302 = scmp.ne.s32.totalorder %s288, %s289
      %p303 = scmp.eq.s32.totalorder %s47, 2
      %p304 = por %p302, %p303
      %p306 = scmp.ne.s32.totalorder %s289, %s305
      %p307 = scmp.eq.s32.totalorder %s47, 0
      %p308 = por %p306, %p307
      %s309 = ssub.s32 %s41, %s48
      %p310 = scmp.eq.s32.totalorder %s309, 0
      %s312 = sadd.s32 %s311, 1
      %s313 = scalar_select %p310, %s311, %s312
      %p316 = pneg %p310
      %p317 = scmp.eq.s32.totalorder %s41, 2
      %p318 = por %p316, %p317
      %p319 = scmp.ne.s32.totalorder %s311, %s314
      %p320 = scmp.eq.s32.totalorder %s41, 0
      %p321 = por %p319, %p320
      %p322 = scmp.ne.s32.totalorder %s311, %s314
      %p323 = scmp.eq.s32.totalorder %s46, 2
      %p324 = por %p322, %p323
      %p325 = scmp.ne.s32.totalorder %s314, %s315
      %p326 = scmp.eq.s32.totalorder %s46, 0
      %p327 = por %p325, %p326
      %p328 = scmp.ne.s32.totalorder %s314, %s315
      %p329 = scmp.eq.s32.totalorder %s47, 2
      %p330 = por %p328, %p329
      %p332 = scmp.ne.s32.totalorder %s315, %s331
      %p333 = scmp.eq.s32.totalorder %s47, 0
      %p334 = por %p332, %p333
      %s335 = ssub.s32 %s41, %s48
      %p336 = scmp.eq.s32.totalorder %s335, 0
      %s338 = sadd.s32 %s337, 1
      %s339 = scalar_select %p336, %s337, %s338
      %p342 = pneg %p336
      %p343 = scmp.eq.s32.totalorder %s41, 2
      %p344 = por %p342, %p343
      %p345 = scmp.ne.s32.totalorder %s337, %s340
      %p346 = scmp.eq.s32.totalorder %s41, 0
      %p347 = por %p345, %p346
      %p348 = scmp.ne.s32.totalorder %s337, %s340
      %p349 = scmp.eq.s32.totalorder %s46, 2
      %p350 = por %p348, %p349
      %p351 = scmp.ne.s32.totalorder %s340, %s341
      %p352 = scmp.eq.s32.totalorder %s46, 0
      %p353 = por %p351, %p352
      %p354 = scmp.ne.s32.totalorder %s340, %s341
      %p355 = scmp.eq.s32.totalorder %s47, 2
      %p356 = por %p354, %p355
      %p358 = scmp.ne.s32.totalorder %s341, %s357
      %p359 = scmp.eq.s32.totalorder %s47, 0
      %p360 = por %p358, %p359
      %s361 = ssub.s32 %s41, %s48
      %p362 = scmp.eq.s32.totalorder %s361, 0
      %s364 = sadd.s32 %s363, 1
      %s365 = scalar_select %p362, %s363, %s364
      %p368 = pneg %p362
      %p369 = scmp.eq.s32.totalorder %s41, 2
      %p370 = por %p368, %p369
      %p371 = scmp.ne.s32.totalorder %s363, %s366
      %p372 = scmp.eq.s32.totalorder %s41, 0
      %p373 = por %p371, %p372
      %p374 = scmp.ne.s32.totalorder %s363, %s366
      %p375 = scmp.eq.s32.totalorder %s46, 2
      %p376 = por %p374, %p375
      %p377 = scmp.ne.s32.totalorder %s366, %s367
      %p378 = scmp.eq.s32.totalorder %s46, 0
      %p379 = por %p377, %p378
      %p380 = scmp.ne.s32.totalorder %s366, %s367
      %p381 = scmp.eq.s32.totalorder %s47, 2
      %p382 = por %p380, %p381
      %p384 = scmp.ne.s32.totalorder %s367, %s383
      %p385 = scmp.eq.s32.totalorder %s47, 0
      %p386 = por %p384, %p385
      %s387 = ssub.s32 %s41, %s48
      %p388 = scmp.eq.s32.totalorder %s387, 0
      %s390 = sadd.s32 %s389, 1
      %s391 = scalar_select %p388, %s389, %s390
      %p394 = pneg %p388
      %p395 = scmp.eq.s32.totalorder %s41, 2
      %p396 = por %p394, %p395
      %p397 = scmp.ne.s32.totalorder %s389, %s392
      %p398 = scmp.eq.s32.totalorder %s41, 0
      %p399 = por %p397, %p398
      %p400 = scmp.ne.s32.totalorder %s389, %s392
      %p401 = scmp.eq.s32.totalorder %s46, 2
      %p402 = por %p400, %p401
      %p403 = scmp.ne.s32.totalorder %s392, %s393
      %p404 = scmp.eq.s32.totalorder %s46, 0
      %p405 = por %p403, %p404
      %p406 = scmp.ne.s32.totalorder %s392, %s393
      %p407 = scmp.eq.s32.totalorder %s47, 2
      %p408 = por %p406, %p407
      %p410 = scmp.ne.s32.totalorder %s393, %s409
      %p411 = scmp.eq.s32.totalorder %s47, 0
      %p412 = por %p410, %p411
      %s413 = ssub.s32 %s41, %s48
      %p414 = scmp.eq.s32.totalorder %s413, 0
      %s416 = sadd.s32 %s415, 1
      %s417 = scalar_select %p414, %s415, %s416
      %p420 = pneg %p414
      %p421 = scmp.eq.s32.totalorder %s41, 2
      %p422 = por %p420, %p421
      %p423 = scmp.ne.s32.totalorder %s415, %s418
      %p424 = scmp.eq.s32.totalorder %s41, 0
      %p425 = por %p423, %p424
      %p426 = scmp.ne.s32.totalorder %s415, %s418
      %p427 = scmp.eq.s32.totalorder %s46, 2
      %p428 = por %p426, %p427
      %p429 = scmp.ne.s32.totalorder %s418, %s419
      %p430 = scmp.eq.s32.totalorder %s46, 0
      %p431 = por %p429, %p430
      %p432 = scmp.ne.s32.totalorder %s418, %s419
      %p433 = scmp.eq.s32.totalorder %s47, 2
      %p434 = por %p432, %p433
      %p436 = scmp.ne.s32.totalorder %s419, %s435
      %p437 = scmp.eq.s32.totalorder %s47, 0
      %p438 = por %p436, %p437
      %s439 = ssub.s32 %s41, %s48
      %p440 = scmp.eq.s32.totalorder %s439, 0
      %s442 = sadd.s32 %s441, 1
      %s443 = scalar_select %p440, %s441, %s442
      %p446 = pneg %p440
      %p447 = scmp.eq.s32.totalorder %s41, 2
      %p448 = por %p446, %p447
      %p449 = scmp.ne.s32.totalorder %s441, %s444
      %p450 = scmp.eq.s32.totalorder %s41, 0
      %p451 = por %p449, %p450
      %p452 = scmp.ne.s32.totalorder %s441, %s444
      %p453 = scmp.eq.s32.totalorder %s46, 2
      %p454 = por %p452, %p453
      %p455 = scmp.ne.s32.totalorder %s444, %s445
      %p456 = scmp.eq.s32.totalorder %s46, 0
      %p457 = por %p455, %p456
      %p458 = scmp.ne.s32.totalorder %s444, %s445
      %p459 = scmp.eq.s32.totalorder %s47, 2
      %p460 = por %p458, %p459
      %p462 = scmp.ne.s32.totalorder %s445, %s461
      %p463 = scmp.eq.s32.totalorder %s47, 0
      %p464 = por %p462, %p463
      %s465 = ssub.s32 %s41, %s48
      %p466 = scmp.eq.s32.totalorder %s465, 0
      %s468 = sadd.s32 %s467, 1
      %s469 = scalar_select %p466, %s467, %s468
      %p472 = pneg %p466
      %p473 = scmp.eq.s32.totalorder %s41, 2
      %p474 = por %p472, %p473
      %p475 = scmp.ne.s32.totalorder %s467, %s470
      %p476 = scmp.eq.s32.totalorder %s41, 0
      %p477 = por %p475, %p476
      %p478 = scmp.ne.s32.totalorder %s467, %s470
      %p479 = scmp.eq.s32.totalorder %s46, 2
      %p480 = por %p478, %p479
      %p481 = scmp.ne.s32.totalorder %s470, %s471
      %p482 = scmp.eq.s32.totalorder %s46, 0
      %p483 = por %p481, %p482
      %p484 = scmp.ne.s32.totalorder %s470, %s471
      %p485 = scmp.eq.s32.totalorder %s47, 2
      %p486 = por %p484, %p485
      %p488 = scmp.ne.s32.totalorder %s471, %s487
      %p489 = scmp.eq.s32.totalorder %s47, 0
      %p490 = por %p488, %p489
      %p491 = scmp.le.s32.totalorder 1, %s41
      %p492 = scmp.lt.s32.totalorder %s41, 4
      %p493 = pnand %p491, %p492
      %p494 = pneg %p493
      // Predicated region
      $region9: #{tpu_custom_call.1} parent=5 // pred_check
        _
      $region10: #{tpu_custom_call.1} parent=5 // pred_check_branch
        %496 = sbr.rel (%p493) target = $region12
      $region11: #{tpu_custom_call.1} parent=5 // pred_region
        %s497 = ssub.s32 %s41, 1
      $region12: #{tpu_custom_call.1} parent=5 // pred_fallthru
        _
      %p498 = scmp.lt.s32.totalorder %s41, 3
      // Predicated region
      $region13: #{tpu_custom_call.1} parent=5 // pred_check
        %p499 = pneg %p498
      $region14: #{tpu_custom_call.1} parent=5 // pred_check_branch
        %501 = sbr.rel (%p499) target = $region16
      $region15: #{tpu_custom_call.1} parent=5 // pred_region
        // Predicated region
        $region17: #{tpu_custom_call.1} parent=15 // pred_check
          %p502 = pneg %p61
        $region18: #{tpu_custom_call.1} parent=15 // pred_check_branch
          %504 = sbr.rel (%p502) target = $region20
        $region19: #{tpu_custom_call.1} parent=15 // pred_region
          %p505 = scmp.lt.s32.totalorder %s41, 2
          %s506 = scalar_select %p505, %s41, 2
          %s507 = smul.addr %s506, 8
          %s508 = scalar_lea.vmem %s2, %s507
        $region20: #{tpu_custom_call.1} parent=15 // pred_fallthru
          _
        // Predicated region
        $region21: #{tpu_custom_call.1} parent=15 // pred_check
          %p509 = pneg %p87
        $region22: #{tpu_custom_call.1} parent=15 // pred_check_branch
          %511 = sbr.rel (%p509) target = $region24
        $region23: #{tpu_custom_call.1} parent=15 // pred_region
          %p512 = scmp.lt.s32.totalorder %s41, 2
          %s513 = scalar_select %p512, %s41, 2
          %s514 = smul.addr %s513, 48
          %s515 = smul.addr %s514, 4
          %s516 = scalar_lea.vmem %s3, %s515
        $region24: #{tpu_custom_call.1} parent=15 // pred_fallthru
          _
        // Predicated region
        $region25: #{tpu_custom_call.1} parent=15 // pred_check
          %p517 = pneg %p113
        $region26: #{tpu_custom_call.1} parent=15 // pred_check_branch
          %519 = sbr.rel (%p517) target = $region28
        $region27: #{tpu_custom_call.1} parent=15 // pred_region
          %p520 = scmp.lt.s32.totalorder %s41, 2
          %s521 = scalar_select %p520, %s41, 2
          %s522 = smul.addr %s521, 3
          %s523 = scalar_lea.vmem %s4, %s522
        $region28: #{tpu_custom_call.1} parent=15 // pred_fallthru
          _
        // Predicated region
        $region29: #{tpu_custom_call.1} parent=15 // pred_check
          %p524 = pneg %p139
        $region30: #{tpu_custom_call.1} parent=15 // pred_check_branch
          %526 = sbr.rel (%p524) target = $region32
        $region31: #{tpu_custom_call.1} parent=15 // pred_region
          %p527 = scmp.lt.s32.totalorder %s41, 2
          %s528 = scalar_select %p527, %s41, 2
          %s529 = smul.addr %s528, 12
          %s530 = smul.addr %s529, 4
          %s531 = scalar_lea.vmem %s5, %s530
        $region32: #{tpu_custom_call.1} parent=15 // pred_fallthru
          _
        // Predicated region
        $region33: #{tpu_custom_call.1} parent=15 // pred_check
          %p532 = pneg %p165
        $region34: #{tpu_custom_call.1} parent=15 // pred_check_branch
          %534 = sbr.rel (%p532) target = $region36
        $region35: #{tpu_custom_call.1} parent=15 // pred_region
          %p535 = scmp.lt.s32.totalorder %s41, 2
          %s536 = scalar_select %p535, %s41, 2
          %s537 = smul.addr %s536, 3
          %s538 = scalar_lea.vmem %s6, %s537
        $region36: #{tpu_custom_call.1} parent=15 // pred_fallthru
          _
        // Predicated region
        $region37: #{tpu_custom_call.1} parent=15 // pred_check
          %p539 = pneg %p191
        $region38: #{tpu_custom_call.1} parent=15 // pred_check_branch
          %541 = sbr.rel (%p539) target = $region40
        $region39: #{tpu_custom_call.1} parent=15 // pred_region
          %p542 = scmp.lt.s32.totalorder %s41, 2
          %s543 = scalar_select %p542, %s41, 2
          %s544 = smul.addr %s543, 12
          %s545 = smul.addr %s544, 4
          %s546 = scalar_lea.vmem %s7, %s545
        $region40: #{tpu_custom_call.1} parent=15 // pred_fallthru
          _
        // Predicated region
        $region41: #{tpu_custom_call.1} parent=15 // pred_check
          %p547 = pneg %p217
        $region42: #{tpu_custom_call.1} parent=15 // pred_check_branch
          %549 = sbr.rel (%p547) target = $region44
        $region43: #{tpu_custom_call.1} parent=15 // pred_region
          %p550 = scmp.lt.s32.totalorder %s41, 2
          %s551 = scalar_select %p550, %s41, 2
          %s552 = smul.addr %s551, 3
          %s553 = scalar_lea.vmem %s8, %s552
        $region44: #{tpu_custom_call.1} parent=15 // pred_fallthru
          _
        // Predicated region
        $region45: #{tpu_custom_call.1} parent=15 // pred_check
          %p554 = pneg %p243
        $region46: #{tpu_custom_call.1} parent=15 // pred_check_branch
          %556 = sbr.rel (%p554) target = $region48
        $region47: #{tpu_custom_call.1} parent=15 // pred_region
          %p557 = scmp.lt.s32.totalorder %s41, 2
          %s558 = scalar_select %p557, %s41, 2
          %s559 = smul.addr %s558, 3
          %s560 = smul.addr %s559, 4
          %s561 = scalar_lea.vmem %s9, %s560
        $region48: #{tpu_custom_call.1} parent=15 // pred_fallthru
          _
        // Predicated region
        $region49: #{tpu_custom_call.1} parent=15 // pred_check
          %p562 = pneg %p269
        $region50: #{tpu_custom_call.1} parent=15 // pred_check_branch
          %564 = sbr.rel (%p562) target = $region52
        $region51: #{tpu_custom_call.1} parent=15 // pred_region
          %p565 = scmp.lt.s32.totalorder %s41, 2
          %s566 = scalar_select %p565, %s41, 2
          %s567 = smul.addr %s566, 3
          %s568 = scalar_lea.vmem %s10, %s567
        $region52: #{tpu_custom_call.1} parent=15 // pred_fallthru
          _
        // Predicated region
        $region53: #{tpu_custom_call.1} parent=15 // pred_check
          %p569 = pneg %p295
        $region54: #{tpu_custom_call.1} parent=15 // pred_check_branch
          %571 = sbr.rel (%p569) target = $region56
        $region55: #{tpu_custom_call.1} parent=15 // pred_region
          %p572 = scmp.lt.s32.totalorder %s41, 2
          %s573 = scalar_select %p572, %s41, 2
          %s574 = smul.addr %s573, 12
          %s575 = smul.addr %s574, 4
          %s576 = scalar_lea.vmem %s11, %s575
        $region56: #{tpu_custom_call.1} parent=15 // pred_fallthru
          _
        // Predicated region
        $region57: #{tpu_custom_call.1} parent=15 // pred_check
          %p577 = pneg %p321
        $region58: #{tpu_custom_call.1} parent=15 // pred_check_branch
          %579 = sbr.rel (%p577) target = $region60
        $region59: #{tpu_custom_call.1} parent=15 // pred_region
          %p580 = scmp.lt.s32.totalorder %s41, 2
          %s581 = scalar_select %p580, %s41, 2
          %s582 = smul.addr %s581, 3
          %s583 = scalar_lea.vmem %s12, %s582
        $region60: #{tpu_custom_call.1} parent=15 // pred_fallthru
          _
        // Predicated region
        $region61: #{tpu_custom_call.1} parent=15 // pred_check
          %p584 = pneg %p347
        $region62: #{tpu_custom_call.1} parent=15 // pred_check_branch
          %586 = sbr.rel (%p584) target = $region64
        $region63: #{tpu_custom_call.1} parent=15 // pred_region
          %p587 = scmp.lt.s32.totalorder %s41, 2
          %s588 = scalar_select %p587, %s41, 2
          %s589 = smul.addr %s588, 12
          %s590 = smul.addr %s589, 4
          %s591 = scalar_lea.vmem %s13, %s590
        $region64: #{tpu_custom_call.1} parent=15 // pred_fallthru
          _
        // Predicated region
        $region65: #{tpu_custom_call.1} parent=15 // pred_check
          %p592 = pneg %p373
        $region66: #{tpu_custom_call.1} parent=15 // pred_check_branch
          %594 = sbr.rel (%p592) target = $region68
        $region67: #{tpu_custom_call.1} parent=15 // pred_region
          %p595 = scmp.lt.s32.totalorder %s41, 2
          %s596 = scalar_select %p595, %s41, 2
          %s597 = smul.addr %s596, 3
          %s598 = scalar_lea.vmem %s14, %s597
        $region68: #{tpu_custom_call.1} parent=15 // pred_fallthru
          _
      $region16: #{tpu_custom_call.1} parent=5 // pred_fallthru
        _
      %p599 = scmp.le.s32.totalorder 1, %s41
      %p600 = scmp.lt.s32.totalorder %s41, 4
      %p601 = pnand %p599, %p600
      %p602 = pneg %p601
      // Predicated region
      $region69: #{tpu_custom_call.1} parent=5 // pred_check
        _
      $region70: #{tpu_custom_call.1} parent=5 // pred_check_branch
        %604 = sbr.rel (%p601) target = $region72
      $region71: #{tpu_custom_call.1} parent=5 // pred_region
        %s605 = ssub.s32 %s41, 1
        %p606 = scmp.lt.s32.totalorder %s46, 2
        %s607 = scalar_select %p606, %s46, 2
        %s608 = smul.addr %s607, 8
        %s609 = scalar_lea.vmem %s2, %s608
        %p610 = pneg %p67
        %p611 = pneg %p64
        %p612 = scmp.lt.s32.totalorder %s46, 2
        %s613 = scalar_select %p612, %s46, 2
        %s614 = smul.addr %s613, 48
        %s615 = smul.addr %s614, 4
        %s616 = scalar_lea.vmem %s3, %s615
        %p617 = pneg %p93
        %p618 = pneg %p90
        %p619 = scmp.lt.s32.totalorder %s46, 2
        %s620 = scalar_select %p619, %s46, 2
        %s621 = smul.addr %s620, 3
        %s622 = scalar_lea.vmem %s4, %s621
        %p623 = pneg %p119
        %p624 = pneg %p116
        %p625 = scmp.lt.s32.totalorder %s46, 2
        %s626 = scalar_select %p625, %s46, 2
        %s627 = smul.addr %s626, 12
        %s628 = smul.addr %s627, 4
        %s629 = scalar_lea.vmem %s5, %s628
        %p630 = pneg %p145
        %p631 = pneg %p142
        %p632 = scmp.lt.s32.totalorder %s46, 2
        %s633 = scalar_select %p632, %s46, 2
        %s634 = smul.addr %s633, 3
        %s635 = scalar_lea.vmem %s6, %s634
        %p636 = pneg %p171
        %p637 = pneg %p168
        %p638 = scmp.lt.s32.totalorder %s46, 2
        %s639 = scalar_select %p638, %s46, 2
        %s640 = smul.addr %s639, 12
        %s641 = smul.addr %s640, 4
        %s642 = scalar_lea.vmem %s7, %s641
        %p643 = pneg %p197
        %p644 = pneg %p194
        %p645 = scmp.lt.s32.totalorder %s46, 2
        %s646 = scalar_select %p645, %s46, 2
        %s647 = smul.addr %s646, 3
        %s648 = scalar_lea.vmem %s8, %s647
        %p649 = pneg %p223
        %p650 = pneg %p220
        %p651 = scmp.lt.s32.totalorder %s46, 2
        %s652 = scalar_select %p651, %s46, 2
        %s653 = smul.addr %s652, 3
        %s654 = smul.addr %s653, 4
        %s655 = scalar_lea.vmem %s9, %s654
        %p656 = pneg %p249
        %p657 = pneg %p246
        %p658 = scmp.lt.s32.totalorder %s46, 2
        %s659 = scalar_select %p658, %s46, 2
        %s660 = smul.addr %s659, 3
        %s661 = scalar_lea.vmem %s10, %s660
        %p662 = pneg %p275
        %p663 = pneg %p272
        %p664 = scmp.lt.s32.totalorder %s46, 2
        %s665 = scalar_select %p664, %s46, 2
        %s666 = smul.addr %s665, 12
        %s667 = smul.addr %s666, 4
        %s668 = scalar_lea.vmem %s11, %s667
        %p669 = pneg %p301
        %p670 = pneg %p298
        %p671 = scmp.lt.s32.totalorder %s46, 2
        %s672 = scalar_select %p671, %s46, 2
        %s673 = smul.addr %s672, 3
        %s674 = scalar_lea.vmem %s12, %s673
        %p675 = pneg %p327
        %p676 = pneg %p324
        %p677 = scmp.lt.s32.totalorder %s46, 2
        %s678 = scalar_select %p677, %s46, 2
        %s679 = smul.addr %s678, 12
        %s680 = smul.addr %s679, 4
        %s681 = scalar_lea.vmem %s13, %s680
        %p682 = pneg %p353
        %p683 = pneg %p350
        %p684 = scmp.lt.s32.totalorder %s46, 2
        %s685 = scalar_select %p684, %s46, 2
        %s686 = smul.addr %s685, 3
        %s687 = scalar_lea.vmem %s14, %s686
        %p688 = pneg %p379
        %p689 = pneg %p376
        %p690 = pneg %p405
        %p691 = pneg %p402
        %s692 = sand.u32 %s392, 1
        %s693 = scalar_lea.sflag [#allocation6], %s692
        %s694 = sand.u32 %s392, 1
        %s695 = smul.addr %s694, 8
        %s696 = scalar_lea.vmem [#allocation5], %s695
        %p697 = pneg %p431
        %p698 = pneg %p428
        %s699 = sand.u32 %s46, 1
        %s700 = scalar_lea.sflag [#allocation8], %s699
        %s701 = sand.u32 %s418, 1
        %s702 = smul.addr %s701, 8
        %s703 = scalar_lea.vmem [#allocation7], %s702
        %p704 = pneg %p457
        %p705 = pneg %p454
        %s706 = sand.u32 %s46, 1
        %s707 = scalar_lea.sflag [#allocation8], %s706
        %s708 = sand.u32 %s444, 1
        %s709 = smul.addr %s708, 8
        %s710 = scalar_lea.vmem [#allocation9], %s709
        %p711 = pneg %p483
        %p712 = pneg %p480
        %p713 = scmp.lt.s32.totalorder %s46, 2
        %s714 = scalar_select %p713, %s46, 2
        %s715 = smul.addr %s714, 8
        %s716 = scalar_lea.vmem %s18, %s715
        %p717 = scmp.lt.s32.totalorder %s46, 2
        %s718 = scalar_select %p717, %s46, 2
        %s719 = smul.addr %s718, 8
        %s720 = scalar_lea.vmem %s2, %s719
        %p721 = scmp.lt.s32.totalorder %s46, 2
        %s722 = scalar_select %p721, %s46, 2
        %s723 = smul.addr %s722, 48
        %s724 = smul.addr %s723, 4
        %s725 = scalar_lea.vmem %s3, %s724
        %p726 = scmp.lt.s32.totalorder %s46, 2
        %s727 = scalar_select %p726, %s46, 2
        %s728 = smul.addr %s727, 3
        %s729 = scalar_lea.vmem %s4, %s728
        %p730 = scmp.lt.s32.totalorder %s46, 2
        %s731 = scalar_select %p730, %s46, 2
        %s732 = smul.addr %s731, 12
        %s733 = smul.addr %s732, 4
        %s734 = scalar_lea.vmem %s5, %s733
        %p735 = scmp.lt.s32.totalorder %s46, 2
        %s736 = scalar_select %p735, %s46, 2
        %s737 = smul.addr %s736, 3
        %s738 = scalar_lea.vmem %s6, %s737
        %p739 = scmp.lt.s32.totalorder %s46, 2
        %s740 = scalar_select %p739, %s46, 2
        %s741 = smul.addr %s740, 12
        %s742 = smul.addr %s741, 4
        %s743 = scalar_lea.vmem %s7, %s742
        %p744 = scmp.lt.s32.totalorder %s46, 2
        %s745 = scalar_select %p744, %s46, 2
        %s746 = smul.addr %s745, 3
        %s747 = scalar_lea.vmem %s8, %s746
        %p748 = scmp.lt.s32.totalorder %s46, 2
        %s749 = scalar_select %p748, %s46, 2
        %s750 = smul.addr %s749, 3
        %s751 = smul.addr %s750, 4
        %s752 = scalar_lea.vmem %s9, %s751
        %p753 = scmp.lt.s32.totalorder %s46, 2
        %s754 = scalar_select %p753, %s46, 2
        %s755 = smul.addr %s754, 3
        %s756 = scalar_lea.vmem %s10, %s755
        %p757 = scmp.lt.s32.totalorder %s46, 2
        %s758 = scalar_select %p757, %s46, 2
        %s759 = smul.addr %s758, 12
        %s760 = smul.addr %s759, 4
        %s761 = scalar_lea.vmem %s11, %s760
        %p762 = scmp.lt.s32.totalorder %s46, 2
        %s763 = scalar_select %p762, %s46, 2
        %s764 = smul.addr %s763, 3
        %s765 = scalar_lea.vmem %s12, %s764
        %p766 = scmp.lt.s32.totalorder %s46, 2
        %s767 = scalar_select %p766, %s46, 2
        %s768 = smul.addr %s767, 12
        %s769 = smul.addr %s768, 4
        %s770 = scalar_lea.vmem %s13, %s769
        %p771 = scmp.lt.s32.totalorder %s46, 2
        %s772 = scalar_select %p771, %s46, 2
        %s773 = smul.addr %s772, 3
        %s774 = scalar_lea.vmem %s14, %s773
        %p775 = scmp.lt.s32.totalorder %s46, 2
        %s776 = scalar_select %p775, %s46, 2
        %s777 = smul.addr %s776, 8
        %s778 = scalar_lea.vmem %s18, %s777
        %s780 = sld [smem:[#allocation3 + %s46]]
        %s781 = sld [smem:[#allocation4 + %s46]]
        %v782 = vld [vmem:[%s720] sm:$0xff]
        %v783 = vpack.c.bf16 %v782, %v782
        %v784 = vlaneseq
        %v785 = vand.u32 %v784, 127
        %v786 = vstv %s781
        %vm787 = vcmp.lt.s32.totalorder %v785, %v786
        %s788 = scvt.s32.f32 %s781
        %v789 = vstv %s788
        %v790 = vrcp.pop %v789
        %s791 = vtos %v790
        %v792 = vld [vmem:[%s725] sm:$0xf]
        %v793 = vld [vmem:[%s725 + $0x4] sm:$0xf]
        %v794 = vld [vmem:[%s725 + $0x8] sm:$0xf]
        %v795 = vld [vmem:[%s725 + $0xc] sm:$0xf]
        %v796 = vld [vmem:[%s725 + $0x10] sm:$0xf]
        %v797 = vld [vmem:[%s725 + $0x14] sm:$0xf]
        %v798 = vld [vmem:[%s725 + $0x18] sm:$0xf]
        %v799 = vld [vmem:[%s725 + $0x1c] sm:$0xf]
        %v800 = vld [vmem:[%s725 + $0x20] sm:$0xf]
        %v801 = vld [vmem:[%s725 + $0x24] sm:$0xf]
        %v802 = vld [vmem:[%s725 + $0x28] sm:$0xf]
        %v803 = vld [vmem:[%s725 + $0x2c] sm:$0xf]
        %v804 = vld [vmem:[%s725 + $0x30] sm:$0xf]
        %v805 = vld [vmem:[%s725 + $0x34] sm:$0xf]
        %v806 = vld [vmem:[%s725 + $0x38] sm:$0xf]
        %v807 = vld [vmem:[%s725 + $0x3c] sm:$0xf]
        %v808 = vld [vmem:[%s729] sm:$0x1]
        %v810 = vlaneseq
        %v811 = vshrl.u32 %v810, 7
        %v812 = vsub.s32 0, %v811
        %v813 = vrot.slane %v808, %v812
        %v831 = vunpack.c.l.b16 %v792
        %v832 = vunpack.c.l.b16 %v793
        %v833 = vunpack.c.l.b16 %v794
        %v834 = vunpack.c.l.b16 %v795
        %v835 = vunpack.c.l.b16 %v796
        %v836 = vunpack.c.l.b16 %v797
        %v837 = vunpack.c.l.b16 %v798
        %v838 = vunpack.c.l.b16 %v799
        %v839 = vunpack.c.l.b16 %v800
        %v840 = vunpack.c.l.b16 %v801
        %v841 = vunpack.c.l.b16 %v802
        %v842 = vunpack.c.l.b16 %v803
        %v843 = vunpack.c.l.b16 %v804
        %v844 = vunpack.c.l.b16 %v805
        %v845 = vunpack.c.l.b16 %v806
        %v846 = vunpack.c.l.b16 %v807
        %v847 = vpack.c.b16 %v832, %v831
        %v848 = vpack.c.b16 %v834, %v833
        %v849 = vpack.c.b16 %v836, %v835
        %v850 = vpack.c.b16 %v838, %v837
        %v851 = vpack.c.b16 %v840, %v839
        %v852 = vpack.c.b16 %v842, %v841
        %v853 = vpack.c.b16 %v844, %v843
        %v854 = vpack.c.b16 %v846, %v845
        %863 = vmatprep.subr.bf16.mxu0 0
        %864 = vmatpush1.bf16.msra.mxu0 %v854
        %865 = vmatprep.subr.bf16.mxu0 0
        %866 = vmatpush1.bf16.msra.mxu0 %v853
        %867 = vmatprep.subr.bf16.mxu0 0
        %868 = vmatpush1.bf16.msra.mxu0 %v852
        %869 = vmatprep.subr.bf16.mxu0 0
        %870 = vmatpush1.bf16.msra.mxu0 %v851
        %871 = vmatprep.subr.bf16.mxu0 0
        %872 = vmatpush1.bf16.msra.mxu0 %v850
        %873 = vmatprep.subr.bf16.mxu0 0
        %874 = vmatpush1.bf16.msra.mxu0 %v849
        %875 = vmatprep.subr.bf16.mxu0 0
        %876 = vmatpush1.bf16.msra.mxu0 %v848
        %877 = vmatprep.subr.bf16.mxu0 0
        %878 = vmatpush1.bf16.msra.mxu0 %v847
        %879 = vmatprep.subr.bf16.mxu0 0
        %880 = vmatpush2.bf16.msra.mxu0 0
        %881 = vmatprep.subr.bf16.mxu0 0
        %882 = vmatpush2.bf16.msra.mxu0 0
        %883 = vmatprep.subr.bf16.mxu0 0
        %884 = vmatpush2.bf16.msra.mxu0 0
        %885 = vmatprep.subr.bf16.mxu0 0
        %886 = vmatpush2.bf16.msra.mxu0 0
        %887 = vmatprep.subr.bf16.mxu0 0
        %888 = vmatpush2.bf16.msra.mxu0 0
        %889 = vmatprep.subr.bf16.mxu0 0
        %890 = vmatpush2.bf16.msra.mxu0 0
        %891 = vmatprep.subr.bf16.mxu0 0
        %892 = vmatpush2.bf16.msra.mxu0 0
        %893 = vmatprep.subr.bf16.mxu0 0
        %894 = vmatpush2.bf16.msra.mxu0 0
        %895 = vmatprep.mubr.bf16.mxu0 0
        %896 = vmatmul.mubr.bf16.gmra.mxu0 %v783
        %v897 = vpop.f32.mrf.mxu0
        %v898 = vadd.f32 %v813, %v897
        %v899 = vpop.f32.mrf.mxu0
        %v900 = vpop.f32.mrf.mxu0
        %v901 = vpop.f32.mrf.mxu0
        %902 = vdwg.mxu0
        %v903 = vmax.f32 %v898, 0.0
        %v904 = vpack.c.bf16 %v903, %v903
        %v905 = vld [vmem:[%s734] sm:$0xf]
        %v906 = vld [vmem:[%s734 + $0x4] sm:$0xf]
        %v907 = vld [vmem:[%s734 + $0x8] sm:$0xf]
        %v908 = vld [vmem:[%s734 + $0xc] sm:$0xf]
        %v909 = vld [vmem:[%s738] sm:$0x1]
        %v911 = vlaneseq
        %v912 = vshrl.u32 %v911, 7
        %v913 = vsub.s32 0, %v912
        %v914 = vrot.slane %v909, %v913
        %v920 = vunpack.c.l.b16 %v905
        %v921 = vunpack.c.l.b16 %v906
        %v922 = vunpack.c.l.b16 %v907
        %v923 = vunpack.c.l.b16 %v908
        %v924 = vpack.c.b16 %v921, %v920
        %v925 = vpack.c.b16 %v923, %v922
        %vm928 = vcmask 261120
        %v930 = vsel %vm928, %v904, 0
        %932 = vmatprep.subr.bf16.mxu0 0
        %933 = vmatpush1.bf16.msra.mxu0 0
        %934 = vmatprep.subr.bf16.mxu0 0
        %935 = vmatpush1.bf16.msra.mxu0 0
        %936 = vmatprep.subr.bf16.mxu0 0
        %937 = vmatpush1.bf16.msra.mxu0 0
        %938 = vmatprep.subr.bf16.mxu0 0
        %939 = vmatpush1.bf16.msra.mxu0 0
        %940 = vmatprep.subr.bf16.mxu0 0
        %941 = vmatpush1.bf16.msra.mxu0 0
        %942 = vmatprep.subr.bf16.mxu0 0
        %943 = vmatpush1.bf16.msra.mxu0 0
        %944 = vmatprep.subr.bf16.mxu0 0
        %945 = vmatpush1.bf16.msra.mxu0 %v925
        %946 = vmatprep.subr.bf16.mxu0 0
        %947 = vmatpush1.bf16.msra.mxu0 %v924
        %948 = vmatprep.subr.bf16.mxu0 0
        %949 = vmatpush2.bf16.msra.mxu0 0
        %950 = vmatprep.subr.bf16.mxu0 0
        %951 = vmatpush2.bf16.msra.mxu0 0
        %952 = vmatprep.subr.bf16.mxu0 0
        %953 = vmatpush2.bf16.msra.mxu0 0
        %954 = vmatprep.subr.bf16.mxu0 0
        %955 = vmatpush2.bf16.msra.mxu0 0
        %956 = vmatprep.subr.bf16.mxu0 0
        %957 = vmatpush2.bf16.msra.mxu0 0
        %958 = vmatprep.subr.bf16.mxu0 0
        %959 = vmatpush2.bf16.msra.mxu0 0
        %960 = vmatprep.subr.bf16.mxu0 0
        %961 = vmatpush2.bf16.msra.mxu0 0
        %962 = vmatprep.subr.bf16.mxu0 0
        %963 = vmatpush2.bf16.msra.mxu0 0
        %964 = vmatprep.mubr.bf16.mxu0 0
        %965 = vmatmul.mubr.bf16.gmra.mxu0 %v930
        %v966 = vpop.f32.mrf.mxu0
        %v967 = vadd.f32 %v914, %v966
        %v968 = vpop.f32.mrf.mxu0
        %v969 = vpop.f32.mrf.mxu0
        %v970 = vpop.f32.mrf.mxu0
        %971 = vdwg.mxu0
        %v972 = vmax.f32 %v967, 0.0
        %v973 = vpack.c.bf16 %v972, %v972
        %v974 = vld [vmem:[%s743] sm:$0xf]
        %v975 = vld [vmem:[%s743 + $0x4] sm:$0xf]
        %v976 = vld [vmem:[%s743 + $0x8] sm:$0xf]
        %v977 = vld [vmem:[%s743 + $0xc] sm:$0xf]
        %v978 = vld [vmem:[%s747] sm:$0x1]
        %v980 = vlaneseq
        %v981 = vshrl.u32 %v980, 7
        %v982 = vsub.s32 0, %v981
        %v983 = vrot.slane %v978, %v982
        %v989 = vunpack.c.l.b16 %v974
        %v990 = vunpack.c.l.b16 %v975
        %v991 = vunpack.c.l.b16 %v976
        %v992 = vunpack.c.l.b16 %v977
        %v993 = vpack.c.b16 %v990, %v989
        %v994 = vpack.c.b16 %v992, %v991
        %v998 = vsel %vm928, %v973, 0
        %1000 = vmatprep.subr.bf16.mxu0 0
        %1001 = vmatpush1.bf16.msra.mxu0 0
        %1002 = vmatprep.subr.bf16.mxu0 0
        %1003 = vmatpush1.bf16.msra.mxu0 0
        %1004 = vmatprep.subr.bf16.mxu0 0
        %1005 = vmatpush1.bf16.msra.mxu0 0
        %1006 = vmatprep.subr.bf16.mxu0 0
        %1007 = vmatpush1.bf16.msra.mxu0 0
        %1008 = vmatprep.subr.bf16.mxu0 0
        %1009 = vmatpush1.bf16.msra.mxu0 0
        %1010 = vmatprep.subr.bf16.mxu0 0
        %1011 = vmatpush1.bf16.msra.mxu0 0
        %1012 = vmatprep.subr.bf16.mxu0 0
        %1013 = vmatpush1.bf16.msra.mxu0 %v994
        %1014 = vmatprep.subr.bf16.mxu0 0
        %1015 = vmatpush1.bf16.msra.mxu0 %v993
        %1016 = vmatprep.subr.bf16.mxu0 0
        %1017 = vmatpush2.bf16.msra.mxu0 0
        %1018 = vmatprep.subr.bf16.mxu0 0
        %1019 = vmatpush2.bf16.msra.mxu0 0
        %1020 = vmatprep.subr.bf16.mxu0 0
        %1021 = vmatpush2.bf16.msra.mxu0 0
        %1022 = vmatprep.subr.bf16.mxu0 0
        %1023 = vmatpush2.bf16.msra.mxu0 0
        %1024 = vmatprep.subr.bf16.mxu0 0
        %1025 = vmatpush2.bf16.msra.mxu0 0
        %1026 = vmatprep.subr.bf16.mxu0 0
        %1027 = vmatpush2.bf16.msra.mxu0 0
        %1028 = vmatprep.subr.bf16.mxu0 0
        %1029 = vmatpush2.bf16.msra.mxu0 0
        %1030 = vmatprep.subr.bf16.mxu0 0
        %1031 = vmatpush2.bf16.msra.mxu0 0
        %1032 = vmatprep.mubr.bf16.mxu0 0
        %1033 = vmatmul.mubr.bf16.gmra.mxu0 %v998
        %v1034 = vpop.f32.mrf.mxu0
        %v1035 = vadd.f32 %v983, %v1034
        %v1036 = vpop.f32.mrf.mxu0
        %v1037 = vpop.f32.mrf.mxu0
        %v1038 = vpop.f32.mrf.mxu0
        %1039 = vdwg.mxu0
        %v1040 = vpack.c.bf16 %v1035, %v1035
        %v1041 = vld [vmem:[%s752] sm:$0xf]
        %v1042 = vld [vmem:[%s756] sm:$0x1]
        %v1044 = vlaneseq
        %v1045 = vshrl.u32 %v1044, 7
        %v1046 = vsub.s32 0, %v1045
        %v1047 = vrot.slane %v1042, %v1046
        %vm1049 = vcmask 64512
        %v1051 = vsel %vm1049, %v1040, 0
        %vm1053 = vcmask 1043456
        %v1055 = vsel %vm1053, %v1041, 0
        %1057 = vmatprep.subr.bf16.mxu0 0
        %1058 = vmatpush1.bf16.msra.mxu0 0
        %1059 = vmatprep.subr.bf16.mxu0 0
        %1060 = vmatpush1.bf16.msra.mxu0 0
        %1061 = vmatprep.subr.bf16.mxu0 0
        %1062 = vmatpush1.bf16.msra.mxu0 0
        %1063 = vmatprep.subr.bf16.mxu0 0
        %1064 = vmatpush1.bf16.msra.mxu0 0
        %1065 = vmatprep.subr.bf16.mxu0 0
        %1066 = vmatpush1.bf16.msra.mxu0 0
        %1067 = vmatprep.subr.bf16.mxu0 0
        %1068 = vmatpush1.bf16.msra.mxu0 0
        %1069 = vmatprep.subr.bf16.mxu0 0
        %1070 = vmatpush1.bf16.msra.mxu0 0
        %1071 = vmatprep.subr.bf16.mxu0 0
        %1072 = vmatpush1.bf16.msra.mxu0 %v1055
        %1073 = vmatprep.subr.bf16.mxu0 0
        %1074 = vmatpush2.bf16.msra.mxu0 0
        %1075 = vmatprep.subr.bf16.mxu0 0
        %1076 = vmatpush2.bf16.msra.mxu0 0
        %1077 = vmatprep.subr.bf16.mxu0 0
        %1078 = vmatpush2.bf16.msra.mxu0 0
        %1079 = vmatprep.subr.bf16.mxu0 0
        %1080 = vmatpush2.bf16.msra.mxu0 0
        %1081 = vmatprep.subr.bf16.mxu0 0
        %1082 = vmatpush2.bf16.msra.mxu0 0
        %1083 = vmatprep.subr.bf16.mxu0 0
        %1084 = vmatpush2.bf16.msra.mxu0 0
        %1085 = vmatprep.subr.bf16.mxu0 0
        %1086 = vmatpush2.bf16.msra.mxu0 0
        %1087 = vmatprep.subr.bf16.mxu0 0
        %1088 = vmatpush2.bf16.msra.mxu0 0
        %1089 = vmatprep.mubr.bf16.mxu0 0
        %1090 = vmatmul.mubr.bf16.gmra.mxu0 %v1051
        %v1091 = vpop.f32.mrf.mxu0
        %v1092 = vadd.f32 %v1047, %v1091
        %v1093 = vpop.f32.mrf.mxu0
        %v1094 = vpop.f32.mrf.mxu0
        %v1095 = vpop.f32.mrf.mxu0
        %1096 = vdwg.mxu0
        %v1097 = vmax.f32 %v1092, 0.0
        %v1098 = vpack.c.bf16 %v1097, %v1097
        %v1099 = vld [vmem:[%s761] sm:$0xf]
        %v1100 = vld [vmem:[%s761 + $0x4] sm:$0xf]
        %v1101 = vld [vmem:[%s761 + $0x8] sm:$0xf]
        %v1102 = vld [vmem:[%s761 + $0xc] sm:$0xf]
        %v1103 = vld [vmem:[%s765] sm:$0x1]
        %v1105 = vlaneseq
        %v1106 = vshrl.u32 %v1105, 7
        %v1107 = vsub.s32 0, %v1106
        %v1108 = vrot.slane %v1103, %v1107
        %v1114 = vunpack.c.l.b16 %v1099
        %v1115 = vunpack.c.l.b16 %v1100
        %v1116 = vunpack.c.l.b16 %v1101
        %v1117 = vunpack.c.l.b16 %v1102
        %v1118 = vpack.c.b16 %v1115, %v1114
        %v1119 = vpack.c.b16 %v1117, %v1116
        %v1123 = vsel %vm928, %v1098, 0
        %1125 = vmatprep.subr.bf16.mxu0 0
        %1126 = vmatpush1.bf16.msra.mxu0 0
        %1127 = vmatprep.subr.bf16.mxu0 0
        %1128 = vmatpush1.bf16.msra.mxu0 0
        %1129 = vmatprep.subr.bf16.mxu0 0
        %1130 = vmatpush1.bf16.msra.mxu0 0
        %1131 = vmatprep.subr.bf16.mxu0 0
        %1132 = vmatpush1.bf16.msra.mxu0 0
        %1133 = vmatprep.subr.bf16.mxu0 0
        %1134 = vmatpush1.bf16.msra.mxu0 0
        %1135 = vmatprep.subr.bf16.mxu0 0
        %1136 = vmatpush1.bf16.msra.mxu0 0
        %1137 = vmatprep.subr.bf16.mxu0 0
        %1138 = vmatpush1.bf16.msra.mxu0 %v1119
        %1139 = vmatprep.subr.bf16.mxu0 0
        %1140 = vmatpush1.bf16.msra.mxu0 %v1118
        %1141 = vmatprep.subr.bf16.mxu0 0
        %1142 = vmatpush2.bf16.msra.mxu0 0
        %1143 = vmatprep.subr.bf16.mxu0 0
        %1144 = vmatpush2.bf16.msra.mxu0 0
        %1145 = vmatprep.subr.bf16.mxu0 0
        %1146 = vmatpush2.bf16.msra.mxu0 0
        %1147 = vmatprep.subr.bf16.mxu0 0
        %1148 = vmatpush2.bf16.msra.mxu0 0
        %1149 = vmatprep.subr.bf16.mxu0 0
        %1150 = vmatpush2.bf16.msra.mxu0 0
        %1151 = vmatprep.subr.bf16.mxu0 0
        %1152 = vmatpush2.bf16.msra.mxu0 0
        %1153 = vmatprep.subr.bf16.mxu0 0
        %1154 = vmatpush2.bf16.msra.mxu0 0
        %1155 = vmatprep.subr.bf16.mxu0 0
        %1156 = vmatpush2.bf16.msra.mxu0 0
        %1157 = vmatprep.mubr.bf16.mxu0 0
        %1158 = vmatmul.mubr.bf16.gmra.mxu0 %v1123
        %v1159 = vpop.f32.mrf.mxu0
        %v1160 = vadd.f32 %v1108, %v1159
        %v1161 = vpop.f32.mrf.mxu0
        %v1162 = vpop.f32.mrf.mxu0
        %v1163 = vpop.f32.mrf.mxu0
        %1164 = vdwg.mxu0
        %v1165 = vmax.f32 %v1160, 0.0
        %v1166 = vpack.c.bf16 %v1165, %v1165
        %v1167 = vld [vmem:[%s770] sm:$0xf]
        %v1168 = vld [vmem:[%s770 + $0x4] sm:$0xf]
        %v1169 = vld [vmem:[%s770 + $0x8] sm:$0xf]
        %v1170 = vld [vmem:[%s770 + $0xc] sm:$0xf]
        %v1171 = vld [vmem:[%s774] sm:$0x1]
        %v1173 = vlaneseq
        %v1174 = vshrl.u32 %v1173, 7
        %v1175 = vsub.s32 0, %v1174
        %v1176 = vrot.slane %v1171, %v1175
        %v1182 = vunpack.c.l.b16 %v1167
        %v1183 = vunpack.c.l.b16 %v1168
        %v1184 = vunpack.c.l.b16 %v1169
        %v1185 = vunpack.c.l.b16 %v1170
        %v1186 = vpack.c.b16 %v1183, %v1182
        %v1187 = vpack.c.b16 %v1185, %v1184
        %v1191 = vsel %vm928, %v1166, 0
        %1193 = vmatprep.subr.bf16.mxu0 0
        %1194 = vmatpush1.bf16.msra.mxu0 0
        %1195 = vmatprep.subr.bf16.mxu0 0
        %1196 = vmatpush1.bf16.msra.mxu0 0
        %1197 = vmatprep.subr.bf16.mxu0 0
        %1198 = vmatpush1.bf16.msra.mxu0 0
        %1199 = vmatprep.subr.bf16.mxu0 0
        %1200 = vmatpush1.bf16.msra.mxu0 0
        %1201 = vmatprep.subr.bf16.mxu0 0
        %1202 = vmatpush1.bf16.msra.mxu0 0
        %1203 = vmatprep.subr.bf16.mxu0 0
        %1204 = vmatpush1.bf16.msra.mxu0 0
        %1205 = vmatprep.subr.bf16.mxu0 0
        %1206 = vmatpush1.bf16.msra.mxu0 %v1187
        %1207 = vmatprep.subr.bf16.mxu0 0
        %1208 = vmatpush1.bf16.msra.mxu0 %v1186
        %1209 = vmatprep.subr.bf16.mxu0 0
        %1210 = vmatpush2.bf16.msra.mxu0 0
        %1211 = vmatprep.subr.bf16.mxu0 0
        %1212 = vmatpush2.bf16.msra.mxu0 0
        %1213 = vmatprep.subr.bf16.mxu0 0
        %1214 = vmatpush2.bf16.msra.mxu0 0
        %1215 = vmatprep.subr.bf16.mxu0 0
        %1216 = vmatpush2.bf16.msra.mxu0 0
        %1217 = vmatprep.subr.bf16.mxu0 0
        %1218 = vmatpush2.bf16.msra.mxu0 0
        %1219 = vmatprep.subr.bf16.mxu0 0
        %1220 = vmatpush2.bf16.msra.mxu0 0
        %1221 = vmatprep.subr.bf16.mxu0 0
        %1222 = vmatpush2.bf16.msra.mxu0 0
        %1223 = vmatprep.subr.bf16.mxu0 0
        %1224 = vmatpush2.bf16.msra.mxu0 0
        %1225 = vmatprep.mubr.bf16.mxu0 0
        %1226 = vmatmul.mubr.bf16.gmra.mxu0 %v1191
        %v1227 = vpop.f32.mrf.mxu0
        %v1228 = vadd.f32 %v1176, %v1227
        %v1229 = vpop.f32.mrf.mxu0
        %v1230 = vpop.f32.mrf.mxu0
        %v1231 = vpop.f32.mrf.mxu0
        %1232 = vdwg.mxu0
        %v1233 = vsub.f32 %v1228, %v782
        %v1234 = vsel %vm787, %v1233, 0.0
        %v1235 = vmul.f32 %v1234, %v1234
        %1236 = vadd.xlane.f32.xlu0 %v1235
        %v1237 = vpop.xlane.xlu0 %1236
        %v1238 = vstv %s791
        %v1239 = vmul.f32 %v1237, %v1238
        %p1240 = scmp.gt.s32.totalorder %s780, 0
        %s1241 = scalar_select %p1240, 1, 0
        %v1242 = vstv %s1241
        %vm1243 = vcmp.eq.s32.totalorder %v1242, 1
        %v1244 = vsel %vm1243, %v1239, inf
        %s1245 = scalar_lea.vmem %s725, 64
        %v1246 = vld [vmem:[%s1245] sm:$0xf]
        %v1247 = vld [vmem:[%s1245 + $0x4] sm:$0xf]
        %v1248 = vld [vmem:[%s1245 + $0x8] sm:$0xf]
        %v1249 = vld [vmem:[%s1245 + $0xc] sm:$0xf]
        %v1250 = vld [vmem:[%s1245 + $0x10] sm:$0xf]
        %v1251 = vld [vmem:[%s1245 + $0x14] sm:$0xf]
        %v1252 = vld [vmem:[%s1245 + $0x18] sm:$0xf]
        %v1253 = vld [vmem:[%s1245 + $0x1c] sm:$0xf]
        %v1254 = vld [vmem:[%s1245 + $0x20] sm:$0xf]
        %v1255 = vld [vmem:[%s1245 + $0x24] sm:$0xf]
        %v1256 = vld [vmem:[%s1245 + $0x28] sm:$0xf]
        %v1257 = vld [vmem:[%s1245 + $0x2c] sm:$0xf]
        %v1258 = vld [vmem:[%s1245 + $0x30] sm:$0xf]
        %v1259 = vld [vmem:[%s1245 + $0x34] sm:$0xf]
        %v1260 = vld [vmem:[%s1245 + $0x38] sm:$0xf]
        %v1261 = vld [vmem:[%s1245 + $0x3c] sm:$0xf]
        %s1262 = scalar_lea.vmem %s729, 1
        %v1263 = vld [vmem:[%s1262] sm:$0x1]
        %v1265 = vlaneseq
        %v1266 = vshrl.u32 %v1265, 7
        %v1267 = vsub.s32 0, %v1266
        %v1268 = vrot.slane %v1263, %v1267
        %v1286 = vunpack.c.l.b16 %v1246
        %v1287 = vunpack.c.l.b16 %v1247
        %v1288 = vunpack.c.l.b16 %v1248
        %v1289 = vunpack.c.l.b16 %v1249
        %v1290 = vunpack.c.l.b16 %v1250
        %v1291 = vunpack.c.l.b16 %v1251
        %v1292 = vunpack.c.l.b16 %v1252
        %v1293 = vunpack.c.l.b16 %v1253
        %v1294 = vunpack.c.l.b16 %v1254
        %v1295 = vunpack.c.l.b16 %v1255
        %v1296 = vunpack.c.l.b16 %v1256
        %v1297 = vunpack.c.l.b16 %v1257
        %v1298 = vunpack.c.l.b16 %v1258
        %v1299 = vunpack.c.l.b16 %v1259
        %v1300 = vunpack.c.l.b16 %v1260
        %v1301 = vunpack.c.l.b16 %v1261
        %v1302 = vpack.c.b16 %v1287, %v1286
        %v1303 = vpack.c.b16 %v1289, %v1288
        %v1304 = vpack.c.b16 %v1291, %v1290
        %v1305 = vpack.c.b16 %v1293, %v1292
        %v1306 = vpack.c.b16 %v1295, %v1294
        %v1307 = vpack.c.b16 %v1297, %v1296
        %v1308 = vpack.c.b16 %v1299, %v1298
        %v1309 = vpack.c.b16 %v1301, %v1300
        %1318 = vmatprep.subr.bf16.mxu0 0
        %1319 = vmatpush1.bf16.msra.mxu0 %v1309
        %1320 = vmatprep.subr.bf16.mxu0 0
        %1321 = vmatpush1.bf16.msra.mxu0 %v1308
        %1322 = vmatprep.subr.bf16.mxu0 0
        %1323 = vmatpush1.bf16.msra.mxu0 %v1307
        %1324 = vmatprep.subr.bf16.mxu0 0
        %1325 = vmatpush1.bf16.msra.mxu0 %v1306
        %1326 = vmatprep.subr.bf16.mxu0 0
        %1327 = vmatpush1.bf16.msra.mxu0 %v1305
        %1328 = vmatprep.subr.bf16.mxu0 0
        %1329 = vmatpush1.bf16.msra.mxu0 %v1304
        %1330 = vmatprep.subr.bf16.mxu0 0
        %1331 = vmatpush1.bf16.msra.mxu0 %v1303
        %1332 = vmatprep.subr.bf16.mxu0 0
        %1333 = vmatpush1.bf16.msra.mxu0 %v1302
        %1334 = vmatprep.subr.bf16.mxu0 0
        %1335 = vmatpush2.bf16.msra.mxu0 0
        %1336 = vmatprep.subr.bf16.mxu0 0
        %1337 = vmatpush2.bf16.msra.mxu0 0
        %1338 = vmatprep.subr.bf16.mxu0 0
        %1339 = vmatpush2.bf16.msra.mxu0 0
        %1340 = vmatprep.subr.bf16.mxu0 0
        %1341 = vmatpush2.bf16.msra.mxu0 0
        %1342 = vmatprep.subr.bf16.mxu0 0
        %1343 = vmatpush2.bf16.msra.mxu0 0
        %1344 = vmatprep.subr.bf16.mxu0 0
        %1345 = vmatpush2.bf16.msra.mxu0 0
        %1346 = vmatprep.subr.bf16.mxu0 0
        %1347 = vmatpush2.bf16.msra.mxu0 0
        %1348 = vmatprep.subr.bf16.mxu0 0
        %1349 = vmatpush2.bf16.msra.mxu0 0
        %1350 = vmatprep.mubr.bf16.mxu0 0
        %1351 = vmatmul.mubr.bf16.gmra.mxu0 %v783
        %v1352 = vpop.f32.mrf.mxu0
        %v1353 = vadd.f32 %v1268, %v1352
        %v1354 = vpop.f32.mrf.mxu0
        %v1355 = vpop.f32.mrf.mxu0
        %v1356 = vpop.f32.mrf.mxu0
        %1357 = vdwg.mxu0
        %v1358 = vmax.f32 %v1353, 0.0
        %v1359 = vpack.c.bf16 %v1358, %v1358
        %s1360 = scalar_lea.vmem %s734, 16
        %v1361 = vld [vmem:[%s1360] sm:$0xf]
        %v1362 = vld [vmem:[%s1360 + $0x4] sm:$0xf]
        %v1363 = vld [vmem:[%s1360 + $0x8] sm:$0xf]
        %v1364 = vld [vmem:[%s1360 + $0xc] sm:$0xf]
        %s1365 = scalar_lea.vmem %s738, 1
        %v1366 = vld [vmem:[%s1365] sm:$0x1]
        %v1368 = vlaneseq
        %v1369 = vshrl.u32 %v1368, 7
        %v1370 = vsub.s32 0, %v1369
        %v1371 = vrot.slane %v1366, %v1370
        %v1377 = vunpack.c.l.b16 %v1361
        %v1378 = vunpack.c.l.b16 %v1362
        %v1379 = vunpack.c.l.b16 %v1363
        %v1380 = vunpack.c.l.b16 %v1364
        %v1381 = vpack.c.b16 %v1378, %v1377
        %v1382 = vpack.c.b16 %v1380, %v1379
        %v1386 = vsel %vm928, %v1359, 0
        %1388 = vmatprep.subr.bf16.mxu0 0
        %1389 = vmatpush1.bf16.msra.mxu0 0
        %1390 = vmatprep.subr.bf16.mxu0 0
        %1391 = vmatpush1.bf16.msra.mxu0 0
        %1392 = vmatprep.subr.bf16.mxu0 0
        %1393 = vmatpush1.bf16.msra.mxu0 0
        %1394 = vmatprep.subr.bf16.mxu0 0
        %1395 = vmatpush1.bf16.msra.mxu0 0
        %1396 = vmatprep.subr.bf16.mxu0 0
        %1397 = vmatpush1.bf16.msra.mxu0 0
        %1398 = vmatprep.subr.bf16.mxu0 0
        %1399 = vmatpush1.bf16.msra.mxu0 0
        %1400 = vmatprep.subr.bf16.mxu0 0
        %1401 = vmatpush1.bf16.msra.mxu0 %v1382
        %1402 = vmatprep.subr.bf16.mxu0 0
        %1403 = vmatpush1.bf16.msra.mxu0 %v1381
        %1404 = vmatprep.subr.bf16.mxu0 0
        %1405 = vmatpush2.bf16.msra.mxu0 0
        %1406 = vmatprep.subr.bf16.mxu0 0
        %1407 = vmatpush2.bf16.msra.mxu0 0
        %1408 = vmatprep.subr.bf16.mxu0 0
        %1409 = vmatpush2.bf16.msra.mxu0 0
        %1410 = vmatprep.subr.bf16.mxu0 0
        %1411 = vmatpush2.bf16.msra.mxu0 0
        %1412 = vmatprep.subr.bf16.mxu0 0
        %1413 = vmatpush2.bf16.msra.mxu0 0
        %1414 = vmatprep.subr.bf16.mxu0 0
        %1415 = vmatpush2.bf16.msra.mxu0 0
        %1416 = vmatprep.subr.bf16.mxu0 0
        %1417 = vmatpush2.bf16.msra.mxu0 0
        %1418 = vmatprep.subr.bf16.mxu0 0
        %1419 = vmatpush2.bf16.msra.mxu0 0
        %1420 = vmatprep.mubr.bf16.mxu0 0
        %1421 = vmatmul.mubr.bf16.gmra.mxu0 %v1386
        %v1422 = vpop.f32.mrf.mxu0
        %v1423 = vadd.f32 %v1371, %v1422
        %v1424 = vpop.f32.mrf.mxu0
        %v1425 = vpop.f32.mrf.mxu0
        %v1426 = vpop.f32.mrf.mxu0
        %1427 = vdwg.mxu0
        %v1428 = vmax.f32 %v1423, 0.0
        %v1429 = vpack.c.bf16 %v1428, %v1428
        %s1430 = scalar_lea.vmem %s743, 16
        %v1431 = vld [vmem:[%s1430] sm:$0xf]
        %v1432 = vld [vmem:[%s1430 + $0x4] sm:$0xf]
        %v1433 = vld [vmem:[%s1430 + $0x8] sm:$0xf]
        %v1434 = vld [vmem:[%s1430 + $0xc] sm:$0xf]
        %s1435 = scalar_lea.vmem %s747, 1
        %v1436 = vld [vmem:[%s1435] sm:$0x1]
        %v1438 = vlaneseq
        %v1439 = vshrl.u32 %v1438, 7
        %v1440 = vsub.s32 0, %v1439
        %v1441 = vrot.slane %v1436, %v1440
        %v1447 = vunpack.c.l.b16 %v1431
        %v1448 = vunpack.c.l.b16 %v1432
        %v1449 = vunpack.c.l.b16 %v1433
        %v1450 = vunpack.c.l.b16 %v1434
        %v1451 = vpack.c.b16 %v1448, %v1447
        %v1452 = vpack.c.b16 %v1450, %v1449
        %v1456 = vsel %vm928, %v1429, 0
        %1458 = vmatprep.subr.bf16.mxu0 0
        %1459 = vmatpush1.bf16.msra.mxu0 0
        %1460 = vmatprep.subr.bf16.mxu0 0
        %1461 = vmatpush1.bf16.msra.mxu0 0
        %1462 = vmatprep.subr.bf16.mxu0 0
        %1463 = vmatpush1.bf16.msra.mxu0 0
        %1464 = vmatprep.subr.bf16.mxu0 0
        %1465 = vmatpush1.bf16.msra.mxu0 0
        %1466 = vmatprep.subr.bf16.mxu0 0
        %1467 = vmatpush1.bf16.msra.mxu0 0
        %1468 = vmatprep.subr.bf16.mxu0 0
        %1469 = vmatpush1.bf16.msra.mxu0 0
        %1470 = vmatprep.subr.bf16.mxu0 0
        %1471 = vmatpush1.bf16.msra.mxu0 %v1452
        %1472 = vmatprep.subr.bf16.mxu0 0
        %1473 = vmatpush1.bf16.msra.mxu0 %v1451
        %1474 = vmatprep.subr.bf16.mxu0 0
        %1475 = vmatpush2.bf16.msra.mxu0 0
        %1476 = vmatprep.subr.bf16.mxu0 0
        %1477 = vmatpush2.bf16.msra.mxu0 0
        %1478 = vmatprep.subr.bf16.mxu0 0
        %1479 = vmatpush2.bf16.msra.mxu0 0
        %1480 = vmatprep.subr.bf16.mxu0 0
        %1481 = vmatpush2.bf16.msra.mxu0 0
        %1482 = vmatprep.subr.bf16.mxu0 0
        %1483 = vmatpush2.bf16.msra.mxu0 0
        %1484 = vmatprep.subr.bf16.mxu0 0
        %1485 = vmatpush2.bf16.msra.mxu0 0
        %1486 = vmatprep.subr.bf16.mxu0 0
        %1487 = vmatpush2.bf16.msra.mxu0 0
        %1488 = vmatprep.subr.bf16.mxu0 0
        %1489 = vmatpush2.bf16.msra.mxu0 0
        %1490 = vmatprep.mubr.bf16.mxu0 0
        %1491 = vmatmul.mubr.bf16.gmra.mxu0 %v1456
        %v1492 = vpop.f32.mrf.mxu0
        %v1493 = vadd.f32 %v1441, %v1492
        %v1494 = vpop.f32.mrf.mxu0
        %v1495 = vpop.f32.mrf.mxu0
        %v1496 = vpop.f32.mrf.mxu0
        %1497 = vdwg.mxu0
        %v1498 = vpack.c.bf16 %v1493, %v1493
        %s1499 = scalar_lea.vmem %s752, 4
        %v1500 = vld [vmem:[%s1499] sm:$0xf]
        %s1501 = scalar_lea.vmem %s756, 1
        %v1502 = vld [vmem:[%s1501] sm:$0x1]
        %v1504 = vlaneseq
        %v1505 = vshrl.u32 %v1504, 7
        %v1506 = vsub.s32 0, %v1505
        %v1507 = vrot.slane %v1502, %v1506
        %v1510 = vsel %vm1049, %v1498, 0
        %v1513 = vsel %vm1053, %v1500, 0
        %1515 = vmatprep.subr.bf16.mxu0 0
        %1516 = vmatpush1.bf16.msra.mxu0 0
        %1517 = vmatprep.subr.bf16.mxu0 0
        %1518 = vmatpush1.bf16.msra.mxu0 0
        %1519 = vmatprep.subr.bf16.mxu0 0
        %1520 = vmatpush1.bf16.msra.mxu0 0
        %1521 = vmatprep.subr.bf16.mxu0 0
        %1522 = vmatpush1.bf16.msra.mxu0 0
        %1523 = vmatprep.subr.bf16.mxu0 0
        %1524 = vmatpush1.bf16.msra.mxu0 0
        %1525 = vmatprep.subr.bf16.mxu0 0
        %1526 = vmatpush1.bf16.msra.mxu0 0
        %1527 = vmatprep.subr.bf16.mxu0 0
        %1528 = vmatpush1.bf16.msra.mxu0 0
        %1529 = vmatprep.subr.bf16.mxu0 0
        %1530 = vmatpush1.bf16.msra.mxu0 %v1513
        %1531 = vmatprep.subr.bf16.mxu0 0
        %1532 = vmatpush2.bf16.msra.mxu0 0
        %1533 = vmatprep.subr.bf16.mxu0 0
        %1534 = vmatpush2.bf16.msra.mxu0 0
        %1535 = vmatprep.subr.bf16.mxu0 0
        %1536 = vmatpush2.bf16.msra.mxu0 0
        %1537 = vmatprep.subr.bf16.mxu0 0
        %1538 = vmatpush2.bf16.msra.mxu0 0
        %1539 = vmatprep.subr.bf16.mxu0 0
        %1540 = vmatpush2.bf16.msra.mxu0 0
        %1541 = vmatprep.subr.bf16.mxu0 0
        %1542 = vmatpush2.bf16.msra.mxu0 0
        %1543 = vmatprep.subr.bf16.mxu0 0
        %1544 = vmatpush2.bf16.msra.mxu0 0
        %1545 = vmatprep.subr.bf16.mxu0 0
        %1546 = vmatpush2.bf16.msra.mxu0 0
        %1547 = vmatprep.mubr.bf16.mxu0 0
        %1548 = vmatmul.mubr.bf16.gmra.mxu0 %v1510
        %v1549 = vpop.f32.mrf.mxu0
        %v1550 = vadd.f32 %v1507, %v1549
        %v1551 = vpop.f32.mrf.mxu0
        %v1552 = vpop.f32.mrf.mxu0
        %v1553 = vpop.f32.mrf.mxu0
        %1554 = vdwg.mxu0
        %v1555 = vmax.f32 %v1550, 0.0
        %v1556 = vpack.c.bf16 %v1555, %v1555
        %s1557 = scalar_lea.vmem %s761, 16
        %v1558 = vld [vmem:[%s1557] sm:$0xf]
        %v1559 = vld [vmem:[%s1557 + $0x4] sm:$0xf]
        %v1560 = vld [vmem:[%s1557 + $0x8] sm:$0xf]
        %v1561 = vld [vmem:[%s1557 + $0xc] sm:$0xf]
        %s1562 = scalar_lea.vmem %s765, 1
        %v1563 = vld [vmem:[%s1562] sm:$0x1]
        %v1565 = vlaneseq
        %v1566 = vshrl.u32 %v1565, 7
        %v1567 = vsub.s32 0, %v1566
        %v1568 = vrot.slane %v1563, %v1567
        %v1574 = vunpack.c.l.b16 %v1558
        %v1575 = vunpack.c.l.b16 %v1559
        %v1576 = vunpack.c.l.b16 %v1560
        %v1577 = vunpack.c.l.b16 %v1561
        %v1578 = vpack.c.b16 %v1575, %v1574
        %v1579 = vpack.c.b16 %v1577, %v1576
        %v1583 = vsel %vm928, %v1556, 0
        %1585 = vmatprep.subr.bf16.mxu0 0
        %1586 = vmatpush1.bf16.msra.mxu0 0
        %1587 = vmatprep.subr.bf16.mxu0 0
        %1588 = vmatpush1.bf16.msra.mxu0 0
        %1589 = vmatprep.subr.bf16.mxu0 0
        %1590 = vmatpush1.bf16.msra.mxu0 0
        %1591 = vmatprep.subr.bf16.mxu0 0
        %1592 = vmatpush1.bf16.msra.mxu0 0
        %1593 = vmatprep.subr.bf16.mxu0 0
        %1594 = vmatpush1.bf16.msra.mxu0 0
        %1595 = vmatprep.subr.bf16.mxu0 0
        %1596 = vmatpush1.bf16.msra.mxu0 0
        %1597 = vmatprep.subr.bf16.mxu0 0
        %1598 = vmatpush1.bf16.msra.mxu0 %v1579
        %1599 = vmatprep.subr.bf16.mxu0 0
        %1600 = vmatpush1.bf16.msra.mxu0 %v1578
        %1601 = vmatprep.subr.bf16.mxu0 0
        %1602 = vmatpush2.bf16.msra.mxu0 0
        %1603 = vmatprep.subr.bf16.mxu0 0
        %1604 = vmatpush2.bf16.msra.mxu0 0
        %1605 = vmatprep.subr.bf16.mxu0 0
        %1606 = vmatpush2.bf16.msra.mxu0 0
        %1607 = vmatprep.subr.bf16.mxu0 0
        %1608 = vmatpush2.bf16.msra.mxu0 0
        %1609 = vmatprep.subr.bf16.mxu0 0
        %1610 = vmatpush2.bf16.msra.mxu0 0
        %1611 = vmatprep.subr.bf16.mxu0 0
        %1612 = vmatpush2.bf16.msra.mxu0 0
        %1613 = vmatprep.subr.bf16.mxu0 0
        %1614 = vmatpush2.bf16.msra.mxu0 0
        %1615 = vmatprep.subr.bf16.mxu0 0
        %1616 = vmatpush2.bf16.msra.mxu0 0
        %1617 = vmatprep.mubr.bf16.mxu0 0
        %1618 = vmatmul.mubr.bf16.gmra.mxu0 %v1583
        %v1619 = vpop.f32.mrf.mxu0
        %v1620 = vadd.f32 %v1568, %v1619
        %v1621 = vpop.f32.mrf.mxu0
        %v1622 = vpop.f32.mrf.mxu0
        %v1623 = vpop.f32.mrf.mxu0
        %1624 = vdwg.mxu0
        %v1625 = vmax.f32 %v1620, 0.0
        %v1626 = vpack.c.bf16 %v1625, %v1625
        %s1627 = scalar_lea.vmem %s770, 16
        %v1628 = vld [vmem:[%s1627] sm:$0xf]
        %v1629 = vld [vmem:[%s1627 + $0x4] sm:$0xf]
        %v1630 = vld [vmem:[%s1627 + $0x8] sm:$0xf]
        %v1631 = vld [vmem:[%s1627 + $0xc] sm:$0xf]
        %s1632 = scalar_lea.vmem %s774, 1
        %v1633 = vld [vmem:[%s1632] sm:$0x1]
        %v1635 = vlaneseq
        %v1636 = vshrl.u32 %v1635, 7
        %v1637 = vsub.s32 0, %v1636
        %v1638 = vrot.slane %v1633, %v1637
        %v1644 = vunpack.c.l.b16 %v1628
        %v1645 = vunpack.c.l.b16 %v1629
        %v1646 = vunpack.c.l.b16 %v1630
        %v1647 = vunpack.c.l.b16 %v1631
        %v1648 = vpack.c.b16 %v1645, %v1644
        %v1649 = vpack.c.b16 %v1647, %v1646
        %v1653 = vsel %vm928, %v1626, 0
        %1655 = vmatprep.subr.bf16.mxu0 0
        %1656 = vmatpush1.bf16.msra.mxu0 0
        %1657 = vmatprep.subr.bf16.mxu0 0
        %1658 = vmatpush1.bf16.msra.mxu0 0
        %1659 = vmatprep.subr.bf16.mxu0 0
        %1660 = vmatpush1.bf16.msra.mxu0 0
        %1661 = vmatprep.subr.bf16.mxu0 0
        %1662 = vmatpush1.bf16.msra.mxu0 0
        %1663 = vmatprep.subr.bf16.mxu0 0
        %1664 = vmatpush1.bf16.msra.mxu0 0
        %1665 = vmatprep.subr.bf16.mxu0 0
        %1666 = vmatpush1.bf16.msra.mxu0 0
        %1667 = vmatprep.subr.bf16.mxu0 0
        %1668 = vmatpush1.bf16.msra.mxu0 %v1649
        %1669 = vmatprep.subr.bf16.mxu0 0
        %1670 = vmatpush1.bf16.msra.mxu0 %v1648
        %1671 = vmatprep.subr.bf16.mxu0 0
        %1672 = vmatpush2.bf16.msra.mxu0 0
        %1673 = vmatprep.subr.bf16.mxu0 0
        %1674 = vmatpush2.bf16.msra.mxu0 0
        %1675 = vmatprep.subr.bf16.mxu0 0
        %1676 = vmatpush2.bf16.msra.mxu0 0
        %1677 = vmatprep.subr.bf16.mxu0 0
        %1678 = vmatpush2.bf16.msra.mxu0 0
        %1679 = vmatprep.subr.bf16.mxu0 0
        %1680 = vmatpush2.bf16.msra.mxu0 0
        %1681 = vmatprep.subr.bf16.mxu0 0
        %1682 = vmatpush2.bf16.msra.mxu0 0
        %1683 = vmatprep.subr.bf16.mxu0 0
        %1684 = vmatpush2.bf16.msra.mxu0 0
        %1685 = vmatprep.subr.bf16.mxu0 0
        %1686 = vmatpush2.bf16.msra.mxu0 0
        %1687 = vmatprep.mubr.bf16.mxu0 0
        %1688 = vmatmul.mubr.bf16.gmra.mxu0 %v1653
        %v1689 = vpop.f32.mrf.mxu0
        %v1690 = vadd.f32 %v1638, %v1689
        %v1691 = vpop.f32.mrf.mxu0
        %v1692 = vpop.f32.mrf.mxu0
        %v1693 = vpop.f32.mrf.mxu0
        %1694 = vdwg.mxu0
        %v1695 = vsub.f32 %v1690, %v782
        %v1696 = vsel %vm787, %v1695, 0.0
        %v1697 = vmul.f32 %v1696, %v1696
        %1698 = vadd.xlane.f32.xlu0 %v1697
        %v1699 = vpop.xlane.xlu0 %1698
        %v1700 = vmul.f32 %v1699, %v1238
        %p1701 = scmp.gt.s32.totalorder %s780, 1
        %s1702 = scalar_select %p1701, 1, 0
        %v1703 = vstv %s1702
        %vm1704 = vcmp.eq.s32.totalorder %v1703, 1
        %v1705 = vsel %vm1704, %v1700, inf
        %vm1706 = vcmp.lt.f32.partialorder %v1705, %v1244
        %v1707 = vsel %vm1706, %v1705, %v1244
        %v1708 = vsel %vm1706, 1, 0
        %vm1709 = vcmp.eq.s32.totalorder %v1708, 1
        %v1710 = vsel %vm1709, %v1493, %v1035
        %v1711 = vsel %vm1709, %v1690, %v1228
        %s1712 = scalar_lea.vmem %s725, 128
        %v1713 = vld [vmem:[%s1712] sm:$0xf]
        %v1714 = vld [vmem:[%s1712 + $0x4] sm:$0xf]
        %v1715 = vld [vmem:[%s1712 + $0x8] sm:$0xf]
        %v1716 = vld [vmem:[%s1712 + $0xc] sm:$0xf]
        %v1717 = vld [vmem:[%s1712 + $0x10] sm:$0xf]
        %v1718 = vld [vmem:[%s1712 + $0x14] sm:$0xf]
        %v1719 = vld [vmem:[%s1712 + $0x18] sm:$0xf]
        %v1720 = vld [vmem:[%s1712 + $0x1c] sm:$0xf]
        %v1721 = vld [vmem:[%s1712 + $0x20] sm:$0xf]
        %v1722 = vld [vmem:[%s1712 + $0x24] sm:$0xf]
        %v1723 = vld [vmem:[%s1712 + $0x28] sm:$0xf]
        %v1724 = vld [vmem:[%s1712 + $0x2c] sm:$0xf]
        %v1725 = vld [vmem:[%s1712 + $0x30] sm:$0xf]
        %v1726 = vld [vmem:[%s1712 + $0x34] sm:$0xf]
        %v1727 = vld [vmem:[%s1712 + $0x38] sm:$0xf]
        %v1728 = vld [vmem:[%s1712 + $0x3c] sm:$0xf]
        %s1729 = scalar_lea.vmem %s729, 2
        %v1730 = vld [vmem:[%s1729] sm:$0x1]
        %v1732 = vlaneseq
        %v1733 = vshrl.u32 %v1732, 7
        %v1734 = vsub.s32 0, %v1733
        %v1735 = vrot.slane %v1730, %v1734
        %v1753 = vunpack.c.l.b16 %v1713
        %v1754 = vunpack.c.l.b16 %v1714
        %v1755 = vunpack.c.l.b16 %v1715
        %v1756 = vunpack.c.l.b16 %v1716
        %v1757 = vunpack.c.l.b16 %v1717
        %v1758 = vunpack.c.l.b16 %v1718
        %v1759 = vunpack.c.l.b16 %v1719
        %v1760 = vunpack.c.l.b16 %v1720
        %v1761 = vunpack.c.l.b16 %v1721
        %v1762 = vunpack.c.l.b16 %v1722
        %v1763 = vunpack.c.l.b16 %v1723
        %v1764 = vunpack.c.l.b16 %v1724
        %v1765 = vunpack.c.l.b16 %v1725
        %v1766 = vunpack.c.l.b16 %v1726
        %v1767 = vunpack.c.l.b16 %v1727
        %v1768 = vunpack.c.l.b16 %v1728
        %v1769 = vpack.c.b16 %v1754, %v1753
        %v1770 = vpack.c.b16 %v1756, %v1755
        %v1771 = vpack.c.b16 %v1758, %v1757
        %v1772 = vpack.c.b16 %v1760, %v1759
        %v1773 = vpack.c.b16 %v1762, %v1761
        %v1774 = vpack.c.b16 %v1764, %v1763
        %v1775 = vpack.c.b16 %v1766, %v1765
        %v1776 = vpack.c.b16 %v1768, %v1767
        %1785 = vmatprep.subr.bf16.mxu0 0
        %1786 = vmatpush1.bf16.msra.mxu0 %v1776
        %1787 = vmatprep.subr.bf16.mxu0 0
        %1788 = vmatpush1.bf16.msra.mxu0 %v1775
        %1789 = vmatprep.subr.bf16.mxu0 0
        %1790 = vmatpush1.bf16.msra.mxu0 %v1774
        %1791 = vmatprep.subr.bf16.mxu0 0
        %1792 = vmatpush1.bf16.msra.mxu0 %v1773
        %1793 = vmatprep.subr.bf16.mxu0 0
        %1794 = vmatpush1.bf16.msra.mxu0 %v1772
        %1795 = vmatprep.subr.bf16.mxu0 0
        %1796 = vmatpush1.bf16.msra.mxu0 %v1771
        %1797 = vmatprep.subr.bf16.mxu0 0
        %1798 = vmatpush1.bf16.msra.mxu0 %v1770
        %1799 = vmatprep.subr.bf16.mxu0 0
        %1800 = vmatpush1.bf16.msra.mxu0 %v1769
        %1801 = vmatprep.subr.bf16.mxu0 0
        %1802 = vmatpush2.bf16.msra.mxu0 0
        %1803 = vmatprep.subr.bf16.mxu0 0
        %1804 = vmatpush2.bf16.msra.mxu0 0
        %1805 = vmatprep.subr.bf16.mxu0 0
        %1806 = vmatpush2.bf16.msra.mxu0 0
        %1807 = vmatprep.subr.bf16.mxu0 0
        %1808 = vmatpush2.bf16.msra.mxu0 0
        %1809 = vmatprep.subr.bf16.mxu0 0
        %1810 = vmatpush2.bf16.msra.mxu0 0
        %1811 = vmatprep.subr.bf16.mxu0 0
        %1812 = vmatpush2.bf16.msra.mxu0 0
        %1813 = vmatprep.subr.bf16.mxu0 0
        %1814 = vmatpush2.bf16.msra.mxu0 0
        %1815 = vmatprep.subr.bf16.mxu0 0
        %1816 = vmatpush2.bf16.msra.mxu0 0
        %1817 = vmatprep.mubr.bf16.mxu0 0
        %1818 = vmatmul.mubr.bf16.gmra.mxu0 %v783
        %v1819 = vpop.f32.mrf.mxu0
        %v1820 = vadd.f32 %v1735, %v1819
        %v1821 = vpop.f32.mrf.mxu0
        %v1822 = vpop.f32.mrf.mxu0
        %v1823 = vpop.f32.mrf.mxu0
        %1824 = vdwg.mxu0
        %v1825 = vmax.f32 %v1820, 0.0
        %v1826 = vpack.c.bf16 %v1825, %v1825
        %s1827 = scalar_lea.vmem %s734, 32
        %v1828 = vld [vmem:[%s1827] sm:$0xf]
        %v1829 = vld [vmem:[%s1827 + $0x4] sm:$0xf]
        %v1830 = vld [vmem:[%s1827 + $0x8] sm:$0xf]
        %v1831 = vld [vmem:[%s1827 + $0xc] sm:$0xf]
        %s1832 = scalar_lea.vmem %s738, 2
        %v1833 = vld [vmem:[%s1832] sm:$0x1]
        %v1835 = vlaneseq
        %v1836 = vshrl.u32 %v1835, 7
        %v1837 = vsub.s32 0, %v1836
        %v1838 = vrot.slane %v1833, %v1837
        %v1844 = vunpack.c.l.b16 %v1828
        %v1845 = vunpack.c.l.b16 %v1829
        %v1846 = vunpack.c.l.b16 %v1830
        %v1847 = vunpack.c.l.b16 %v1831
        %v1848 = vpack.c.b16 %v1845, %v1844
        %v1849 = vpack.c.b16 %v1847, %v1846
        %v1853 = vsel %vm928, %v1826, 0
        %1855 = vmatprep.subr.bf16.mxu0 0
        %1856 = vmatpush1.bf16.msra.mxu0 0
        %1857 = vmatprep.subr.bf16.mxu0 0
        %1858 = vmatpush1.bf16.msra.mxu0 0
        %1859 = vmatprep.subr.bf16.mxu0 0
        %1860 = vmatpush1.bf16.msra.mxu0 0
        %1861 = vmatprep.subr.bf16.mxu0 0
        %1862 = vmatpush1.bf16.msra.mxu0 0
        %1863 = vmatprep.subr.bf16.mxu0 0
        %1864 = vmatpush1.bf16.msra.mxu0 0
        %1865 = vmatprep.subr.bf16.mxu0 0
        %1866 = vmatpush1.bf16.msra.mxu0 0
        %1867 = vmatprep.subr.bf16.mxu0 0
        %1868 = vmatpush1.bf16.msra.mxu0 %v1849
        %1869 = vmatprep.subr.bf16.mxu0 0
        %1870 = vmatpush1.bf16.msra.mxu0 %v1848
        %1871 = vmatprep.subr.bf16.mxu0 0
        %1872 = vmatpush2.bf16.msra.mxu0 0
        %1873 = vmatprep.subr.bf16.mxu0 0
        %1874 = vmatpush2.bf16.msra.mxu0 0
        %1875 = vmatprep.subr.bf16.mxu0 0
        %1876 = vmatpush2.bf16.msra.mxu0 0
        %1877 = vmatprep.subr.bf16.mxu0 0
        %1878 = vmatpush2.bf16.msra.mxu0 0
        %1879 = vmatprep.subr.bf16.mxu0 0
        %1880 = vmatpush2.bf16.msra.mxu0 0
        %1881 = vmatprep.subr.bf16.mxu0 0
        %1882 = vmatpush2.bf16.msra.mxu0 0
        %1883 = vmatprep.subr.bf16.mxu0 0
        %1884 = vmatpush2.bf16.msra.mxu0 0
        %1885 = vmatprep.subr.bf16.mxu0 0
        %1886 = vmatpush2.bf16.msra.mxu0 0
        %1887 = vmatprep.mubr.bf16.mxu0 0
        %1888 = vmatmul.mubr.bf16.gmra.mxu0 %v1853
        %v1889 = vpop.f32.mrf.mxu0
        %v1890 = vadd.f32 %v1838, %v1889
        %v1891 = vpop.f32.mrf.mxu0
        %v1892 = vpop.f32.mrf.mxu0
        %v1893 = vpop.f32.mrf.mxu0
        %1894 = vdwg.mxu0
        %v1895 = vmax.f32 %v1890, 0.0
        %v1896 = vpack.c.bf16 %v1895, %v1895
        %s1897 = scalar_lea.vmem %s743, 32
        %v1898 = vld [vmem:[%s1897] sm:$0xf]
        %v1899 = vld [vmem:[%s1897 + $0x4] sm:$0xf]
        %v1900 = vld [vmem:[%s1897 + $0x8] sm:$0xf]
        %v1901 = vld [vmem:[%s1897 + $0xc] sm:$0xf]
        %s1902 = scalar_lea.vmem %s747, 2
        %v1903 = vld [vmem:[%s1902] sm:$0x1]
        %v1905 = vlaneseq
        %v1906 = vshrl.u32 %v1905, 7
        %v1907 = vsub.s32 0, %v1906
        %v1908 = vrot.slane %v1903, %v1907
        %v1914 = vunpack.c.l.b16 %v1898
        %v1915 = vunpack.c.l.b16 %v1899
        %v1916 = vunpack.c.l.b16 %v1900
        %v1917 = vunpack.c.l.b16 %v1901
        %v1918 = vpack.c.b16 %v1915, %v1914
        %v1919 = vpack.c.b16 %v1917, %v1916
        %v1923 = vsel %vm928, %v1896, 0
        %1925 = vmatprep.subr.bf16.mxu0 0
        %1926 = vmatpush1.bf16.msra.mxu0 0
        %1927 = vmatprep.subr.bf16.mxu0 0
        %1928 = vmatpush1.bf16.msra.mxu0 0
        %1929 = vmatprep.subr.bf16.mxu0 0
        %1930 = vmatpush1.bf16.msra.mxu0 0
        %1931 = vmatprep.subr.bf16.mxu0 0
        %1932 = vmatpush1.bf16.msra.mxu0 0
        %1933 = vmatprep.subr.bf16.mxu0 0
        %1934 = vmatpush1.bf16.msra.mxu0 0
        %1935 = vmatprep.subr.bf16.mxu0 0
        %1936 = vmatpush1.bf16.msra.mxu0 0
        %1937 = vmatprep.subr.bf16.mxu0 0
        %1938 = vmatpush1.bf16.msra.mxu0 %v1919
        %1939 = vmatprep.subr.bf16.mxu0 0
        %1940 = vmatpush1.bf16.msra.mxu0 %v1918
        %1941 = vmatprep.subr.bf16.mxu0 0
        %1942 = vmatpush2.bf16.msra.mxu0 0
        %1943 = vmatprep.subr.bf16.mxu0 0
        %1944 = vmatpush2.bf16.msra.mxu0 0
        %1945 = vmatprep.subr.bf16.mxu0 0
        %1946 = vmatpush2.bf16.msra.mxu0 0
        %1947 = vmatprep.subr.bf16.mxu0 0
        %1948 = vmatpush2.bf16.msra.mxu0 0
        %1949 = vmatprep.subr.bf16.mxu0 0
        %1950 = vmatpush2.bf16.msra.mxu0 0
        %1951 = vmatprep.subr.bf16.mxu0 0
        %1952 = vmatpush2.bf16.msra.mxu0 0
        %1953 = vmatprep.subr.bf16.mxu0 0
        %1954 = vmatpush2.bf16.msra.mxu0 0
        %1955 = vmatprep.subr.bf16.mxu0 0
        %1956 = vmatpush2.bf16.msra.mxu0 0
        %1957 = vmatprep.mubr.bf16.mxu0 0
        %1958 = vmatmul.mubr.bf16.gmra.mxu0 %v1923
        %v1959 = vpop.f32.mrf.mxu0
        %v1960 = vadd.f32 %v1908, %v1959
        %v1961 = vpop.f32.mrf.mxu0
        %v1962 = vpop.f32.mrf.mxu0
        %v1963 = vpop.f32.mrf.mxu0
        %1964 = vdwg.mxu0
        %v1965 = vpack.c.bf16 %v1960, %v1960
        %s1966 = scalar_lea.vmem %s752, 8
        %v1967 = vld [vmem:[%s1966] sm:$0xf]
        %s1968 = scalar_lea.vmem %s756, 2
        %v1969 = vld [vmem:[%s1968] sm:$0x1]
        %v1971 = vlaneseq
        %v1972 = vshrl.u32 %v1971, 7
        %v1973 = vsub.s32 0, %v1972
        %v1974 = vrot.slane %v1969, %v1973
        %v1977 = vsel %vm1049, %v1965, 0
        %v1980 = vsel %vm1053, %v1967, 0
        %1982 = vmatprep.subr.bf16.mxu0 0
        %1983 = vmatpush1.bf16.msra.mxu0 0
        %1984 = vmatprep.subr.bf16.mxu0 0
        %1985 = vmatpush1.bf16.msra.mxu0 0
        %1986 = vmatprep.subr.bf16.mxu0 0
        %1987 = vmatpush1.bf16.msra.mxu0 0
        %1988 = vmatprep.subr.bf16.mxu0 0
        %1989 = vmatpush1.bf16.msra.mxu0 0
        %1990 = vmatprep.subr.bf16.mxu0 0
        %1991 = vmatpush1.bf16.msra.mxu0 0
        %1992 = vmatprep.subr.bf16.mxu0 0
        %1993 = vmatpush1.bf16.msra.mxu0 0
        %1994 = vmatprep.subr.bf16.mxu0 0
        %1995 = vmatpush1.bf16.msra.mxu0 0
        %1996 = vmatprep.subr.bf16.mxu0 0
        %1997 = vmatpush1.bf16.msra.mxu0 %v1980
        %1998 = vmatprep.subr.bf16.mxu0 0
        %1999 = vmatpush2.bf16.msra.mxu0 0
        %2000 = vmatprep.subr.bf16.mxu0 0
        %2001 = vmatpush2.bf16.msra.mxu0 0
        %2002 = vmatprep.subr.bf16.mxu0 0
        %2003 = vmatpush2.bf16.msra.mxu0 0
        %2004 = vmatprep.subr.bf16.mxu0 0
        %2005 = vmatpush2.bf16.msra.mxu0 0
        %2006 = vmatprep.subr.bf16.mxu0 0
        %2007 = vmatpush2.bf16.msra.mxu0 0
        %2008 = vmatprep.subr.bf16.mxu0 0
        %2009 = vmatpush2.bf16.msra.mxu0 0
        %2010 = vmatprep.subr.bf16.mxu0 0
        %2011 = vmatpush2.bf16.msra.mxu0 0
        %2012 = vmatprep.subr.bf16.mxu0 0
        %2013 = vmatpush2.bf16.msra.mxu0 0
        %2014 = vmatprep.mubr.bf16.mxu0 0
        %2015 = vmatmul.mubr.bf16.gmra.mxu0 %v1977
        %v2016 = vpop.f32.mrf.mxu0
        %v2017 = vadd.f32 %v1974, %v2016
        %v2018 = vpop.f32.mrf.mxu0
        %v2019 = vpop.f32.mrf.mxu0
        %v2020 = vpop.f32.mrf.mxu0
        %2021 = vdwg.mxu0
        %v2022 = vmax.f32 %v2017, 0.0
        %v2023 = vpack.c.bf16 %v2022, %v2022
        %s2024 = scalar_lea.vmem %s761, 32
        %v2025 = vld [vmem:[%s2024] sm:$0xf]
        %v2026 = vld [vmem:[%s2024 + $0x4] sm:$0xf]
        %v2027 = vld [vmem:[%s2024 + $0x8] sm:$0xf]
        %v2028 = vld [vmem:[%s2024 + $0xc] sm:$0xf]
        %s2029 = scalar_lea.vmem %s765, 2
        %v2030 = vld [vmem:[%s2029] sm:$0x1]
        %v2032 = vlaneseq
        %v2033 = vshrl.u32 %v2032, 7
        %v2034 = vsub.s32 0, %v2033
        %v2035 = vrot.slane %v2030, %v2034
        %v2041 = vunpack.c.l.b16 %v2025
        %v2042 = vunpack.c.l.b16 %v2026
        %v2043 = vunpack.c.l.b16 %v2027
        %v2044 = vunpack.c.l.b16 %v2028
        %v2045 = vpack.c.b16 %v2042, %v2041
        %v2046 = vpack.c.b16 %v2044, %v2043
        %v2050 = vsel %vm928, %v2023, 0
        %2052 = vmatprep.subr.bf16.mxu0 0
        %2053 = vmatpush1.bf16.msra.mxu0 0
        %2054 = vmatprep.subr.bf16.mxu0 0
        %2055 = vmatpush1.bf16.msra.mxu0 0
        %2056 = vmatprep.subr.bf16.mxu0 0
        %2057 = vmatpush1.bf16.msra.mxu0 0
        %2058 = vmatprep.subr.bf16.mxu0 0
        %2059 = vmatpush1.bf16.msra.mxu0 0
        %2060 = vmatprep.subr.bf16.mxu0 0
        %2061 = vmatpush1.bf16.msra.mxu0 0
        %2062 = vmatprep.subr.bf16.mxu0 0
        %2063 = vmatpush1.bf16.msra.mxu0 0
        %2064 = vmatprep.subr.bf16.mxu0 0
        %2065 = vmatpush1.bf16.msra.mxu0 %v2046
        %2066 = vmatprep.subr.bf16.mxu0 0
        %2067 = vmatpush1.bf16.msra.mxu0 %v2045
        %2068 = vmatprep.subr.bf16.mxu0 0
        %2069 = vmatpush2.bf16.msra.mxu0 0
        %2070 = vmatprep.subr.bf16.mxu0 0
        %2071 = vmatpush2.bf16.msra.mxu0 0
        %2072 = vmatprep.subr.bf16.mxu0 0
        %2073 = vmatpush2.bf16.msra.mxu0 0
        %2074 = vmatprep.subr.bf16.mxu0 0
        %2075 = vmatpush2.bf16.msra.mxu0 0
        %2076 = vmatprep.subr.bf16.mxu0 0
        %2077 = vmatpush2.bf16.msra.mxu0 0
        %2078 = vmatprep.subr.bf16.mxu0 0
        %2079 = vmatpush2.bf16.msra.mxu0 0
        %2080 = vmatprep.subr.bf16.mxu0 0
        %2081 = vmatpush2.bf16.msra.mxu0 0
        %2082 = vmatprep.subr.bf16.mxu0 0
        %2083 = vmatpush2.bf16.msra.mxu0 0
        %2084 = vmatprep.mubr.bf16.mxu0 0
        %2085 = vmatmul.mubr.bf16.gmra.mxu0 %v2050
        %v2086 = vpop.f32.mrf.mxu0
        %v2087 = vadd.f32 %v2035, %v2086
        %v2088 = vpop.f32.mrf.mxu0
        %v2089 = vpop.f32.mrf.mxu0
        %v2090 = vpop.f32.mrf.mxu0
        %2091 = vdwg.mxu0
        %v2092 = vmax.f32 %v2087, 0.0
        %v2093 = vpack.c.bf16 %v2092, %v2092
        %s2094 = scalar_lea.vmem %s770, 32
        %v2095 = vld [vmem:[%s2094] sm:$0xf]
        %v2096 = vld [vmem:[%s2094 + $0x4] sm:$0xf]
        %v2097 = vld [vmem:[%s2094 + $0x8] sm:$0xf]
        %v2098 = vld [vmem:[%s2094 + $0xc] sm:$0xf]
        %s2099 = scalar_lea.vmem %s774, 2
        %v2100 = vld [vmem:[%s2099] sm:$0x1]
        %v2102 = vlaneseq
        %v2103 = vshrl.u32 %v2102, 7
        %v2104 = vsub.s32 0, %v2103
        %v2105 = vrot.slane %v2100, %v2104
        %v2111 = vunpack.c.l.b16 %v2095
        %v2112 = vunpack.c.l.b16 %v2096
        %v2113 = vunpack.c.l.b16 %v2097
        %v2114 = vunpack.c.l.b16 %v2098
        %v2115 = vpack.c.b16 %v2112, %v2111
        %v2116 = vpack.c.b16 %v2114, %v2113
        %v2120 = vsel %vm928, %v2093, 0
        %2122 = vmatprep.subr.bf16.mxu0 0
        %2123 = vmatpush1.bf16.msra.mxu0 0
        %2124 = vmatprep.subr.bf16.mxu0 0
        %2125 = vmatpush1.bf16.msra.mxu0 0
        %2126 = vmatprep.subr.bf16.mxu0 0
        %2127 = vmatpush1.bf16.msra.mxu0 0
        %2128 = vmatprep.subr.bf16.mxu0 0
        %2129 = vmatpush1.bf16.msra.mxu0 0
        %2130 = vmatprep.subr.bf16.mxu0 0
        %2131 = vmatpush1.bf16.msra.mxu0 0
        %2132 = vmatprep.subr.bf16.mxu0 0
        %2133 = vmatpush1.bf16.msra.mxu0 0
        %2134 = vmatprep.subr.bf16.mxu0 0
        %2135 = vmatpush1.bf16.msra.mxu0 %v2116
        %2136 = vmatprep.subr.bf16.mxu0 0
        %2137 = vmatpush1.bf16.msra.mxu0 %v2115
        %2138 = vmatprep.subr.bf16.mxu0 0
        %2139 = vmatpush2.bf16.msra.mxu0 0
        %2140 = vmatprep.subr.bf16.mxu0 0
        %2141 = vmatpush2.bf16.msra.mxu0 0
        %2142 = vmatprep.subr.bf16.mxu0 0
        %2143 = vmatpush2.bf16.msra.mxu0 0
        %2144 = vmatprep.subr.bf16.mxu0 0
        %2145 = vmatpush2.bf16.msra.mxu0 0
        %2146 = vmatprep.subr.bf16.mxu0 0
        %2147 = vmatpush2.bf16.msra.mxu0 0
        %2148 = vmatprep.subr.bf16.mxu0 0
        %2149 = vmatpush2.bf16.msra.mxu0 0
        %2150 = vmatprep.subr.bf16.mxu0 0
        %2151 = vmatpush2.bf16.msra.mxu0 0
        %2152 = vmatprep.subr.bf16.mxu0 0
        %2153 = vmatpush2.bf16.msra.mxu0 0
        %2154 = vmatprep.mubr.bf16.mxu0 0
        %2155 = vmatmul.mubr.bf16.gmra.mxu0 %v2120
        %v2156 = vpop.f32.mrf.mxu0
        %v2157 = vadd.f32 %v2105, %v2156
        %v2158 = vpop.f32.mrf.mxu0
        %v2159 = vpop.f32.mrf.mxu0
        %v2160 = vpop.f32.mrf.mxu0
        %2161 = vdwg.mxu0
        %v2162 = vsub.f32 %v2157, %v782
        %v2163 = vsel %vm787, %v2162, 0.0
        %v2164 = vmul.f32 %v2163, %v2163
        %2165 = vadd.xlane.f32.xlu0 %v2164
        %v2166 = vpop.xlane.xlu0 %2165
        %v2167 = vmul.f32 %v2166, %v1238
        %p2168 = scmp.gt.s32.totalorder %s780, 2
        %s2169 = scalar_select %p2168, 1, 0
        %v2170 = vstv %s2169
        %vm2171 = vcmp.eq.s32.totalorder %v2170, 1
        %v2172 = vsel %vm2171, %v2167, inf
        %vm2173 = vcmp.lt.f32.partialorder %v2172, %v1707
        %v2174 = vsel %vm2173, 1, 0
        %vm2175 = vcmp.eq.s32.totalorder %v2174, 1
        %v2176 = vsel %vm2175, %v1960, %v1710
        %v2177 = vsel %vm2175, %v2157, %v1711
        %v2178 = vsel %vm2173, 2, %v1708
        %2179 = vst.msk [vmem:[%s696] sm:$0xff] %vm1049, %v2176
        %2181 = vrot.lane.b32.xlu0 %v2176, 120
        %v2182 = vpop.permute.xlu0 %2181
        %2184 = vst.msk [vmem:[%s703] sm:$0xff] %vm1049, %v2182
        %2185 = vst [vmem:[%s710] sm:$0xff] %v2177
        %vm2186 = vcmask 7168
        %2187 = vst.msk [vmem:[%s778] sm:$0xff] %vm2186, %v2178
        %s2188 = sand.u32 %s392, 1
        %s2189 = scalar_lea.sflag [#allocation6], %s2188
        %s2190 = sand.u32 %s392, 1
        %s2191 = smul.addr %s2190, 8
        %s2192 = scalar_lea.vmem [#allocation5], %s2191
        %s2193 = sand.u32 %s46, 1
        %s2194 = scalar_lea.sflag [#allocation8], %s2193
        %s2195 = sand.u32 %s418, 1
        %s2196 = smul.addr %s2195, 8
        %s2197 = scalar_lea.vmem [#allocation7], %s2196
        %s2198 = sand.u32 %s46, 1
        %s2199 = scalar_lea.sflag [#allocation8], %s2198
        %s2200 = sand.u32 %s444, 1
        %s2201 = smul.addr %s2200, 8
        %s2202 = scalar_lea.vmem [#allocation9], %s2201
        %p2203 = scmp.lt.s32.totalorder %s46, 2
        %s2204 = scalar_select %p2203, %s46, 2
        %s2205 = smul.addr %s2204, 8
        %s2206 = scalar_lea.vmem %s18, %s2205
        // Predicated region
        $region73: #{tpu_custom_call.1} parent=71 // pred_check
          %p2207 = pneg %p402
        $region74: #{tpu_custom_call.1} parent=71 // pred_check_branch
          %2209 = sbr.rel (%p2207) target = $region76
        $region75: #{tpu_custom_call.1} parent=71 // pred_region
          %s2211 = ssub.s32 128, 128
          %2212 = vsyncadd %s2189, %s2211
          %s2213 = smul.addr %s46, 128
          %s2214 = scalar_lea.hbm %s15, %s2213
          %s2216 = sshll.u32 %s2192, 4
          %s2217 = int_to_ptr.vmem [resolvable:$true] %s2216
          %2219 = dma.vmem_to_hbm [thread:$0]  %s2217, 128, %s2214, %s2189
        $region76: #{tpu_custom_call.1} parent=71 // pred_fallthru
          _
        // Predicated region
        $region77: #{tpu_custom_call.1} parent=71 // pred_check
          %p2220 = pneg %p428
        $region78: #{tpu_custom_call.1} parent=71 // pred_check_branch
          %2222 = sbr.rel (%p2220) target = $region80
        $region79: #{tpu_custom_call.1} parent=71 // pred_region
          %s2224 = ssub.s32 128, 128
          %2225 = vsyncadd %s2194, %s2224
          %s2226 = smul.addr %s46, 128
          %s2227 = scalar_lea.hbm %s16, %s2226
          %s2229 = sshll.u32 %s2197, 4
          %s2230 = int_to_ptr.vmem [resolvable:$true] %s2229
          %2232 = dma.vmem_to_hbm [thread:$0]  %s2230, 128, %s2227, %s2194
        $region80: #{tpu_custom_call.1} parent=71 // pred_fallthru
          _
        // Predicated region
        $region81: #{tpu_custom_call.1} parent=71 // pred_check
          %p2233 = pneg %p454
        $region82: #{tpu_custom_call.1} parent=71 // pred_check_branch
          %2235 = sbr.rel (%p2233) target = $region84
        $region83: #{tpu_custom_call.1} parent=71 // pred_region
          %s2237 = ssub.s32 128, 128
          %2238 = vsyncadd %s2199, %s2237
          %s2239 = smul.addr %s46, 128
          %s2240 = scalar_lea.hbm %s17, %s2239
          %s2242 = sshll.u32 %s2202, 4
          %s2243 = int_to_ptr.vmem [resolvable:$true] %s2242
          %2245 = dma.vmem_to_hbm [thread:$0]  %s2243, 128, %s2240, %s2199
        $region84: #{tpu_custom_call.1} parent=71 // pred_fallthru
          _
        // Predicated region
        $region85: #{tpu_custom_call.1} parent=71 // pred_check
          %p2246 = pneg %p480
        $region86: #{tpu_custom_call.1} parent=71 // pred_check_branch
          %2248 = sbr.rel (%p2246) target = $region88
        $region87: #{tpu_custom_call.1} parent=71 // pred_region
          _
        $region88: #{tpu_custom_call.1} parent=71 // pred_fallthru
          _
      $region72: #{tpu_custom_call.1} parent=5 // pred_fallthru
        _
      %p2249 = scmp.le.s32.totalorder 2, %s41
      // Predicated region
      $region89: #{tpu_custom_call.1} parent=5 // pred_check
        %p2250 = pneg %p2249
      $region90: #{tpu_custom_call.1} parent=5 // pred_check_branch
        %2252 = sbr.rel (%p2250) target = $region92
      $region91: #{tpu_custom_call.1} parent=5 // pred_region
        %s2253 = ssub.s32 %s41, 2
        // Predicated region
        $region93: #{tpu_custom_call.1} parent=91 // pred_check
          %p2254 = pneg %p408
        $region94: #{tpu_custom_call.1} parent=91 // pred_check_branch
          %2256 = sbr.rel (%p2254) target = $region96
        $region95: #{tpu_custom_call.1} parent=91 // pred_region
          %s2257 = sand.u32 %s393, 1
          %s2258 = scalar_lea.sflag [#allocation6], %s2257
          %s2259 = sand.u32 %s393, 1
          %s2260 = smul.addr %s2259, 8
          %s2261 = scalar_lea.vmem [#allocation5], %s2260
          %2262 = dma.done %s2258, 128
        $region96: #{tpu_custom_call.1} parent=91 // pred_fallthru
          _
        // Predicated region
        $region97: #{tpu_custom_call.1} parent=91 // pred_check
          %p2263 = pneg %p434
        $region98: #{tpu_custom_call.1} parent=91 // pred_check_branch
          %2265 = sbr.rel (%p2263) target = $region100
        $region99: #{tpu_custom_call.1} parent=91 // pred_region
          %s2266 = sand.u32 %s47, 1
          %s2267 = scalar_lea.sflag [#allocation8], %s2266
          %s2268 = sand.u32 %s419, 1
          %s2269 = smul.addr %s2268, 8
          %s2270 = scalar_lea.vmem [#allocation7], %s2269
          %2271 = dma.done %s2267, 128
        $region100: #{tpu_custom_call.1} parent=91 // pred_fallthru
          _
        // Predicated region
        $region101: #{tpu_custom_call.1} parent=91 // pred_check
          %p2272 = pneg %p460
        $region102: #{tpu_custom_call.1} parent=91 // pred_check_branch
          %2274 = sbr.rel (%p2272) target = $region104
        $region103: #{tpu_custom_call.1} parent=91 // pred_region
          %s2275 = sand.u32 %s47, 1
          %s2276 = scalar_lea.sflag [#allocation8], %s2275
          %s2277 = sand.u32 %s445, 1
          %s2278 = smul.addr %s2277, 8
          %s2279 = scalar_lea.vmem [#allocation9], %s2278
          %2280 = dma.done %s2276, 128
        $region104: #{tpu_custom_call.1} parent=91 // pred_fallthru
          _
        // Predicated region
        $region105: #{tpu_custom_call.1} parent=91 // pred_check
          %p2281 = pneg %p486
        $region106: #{tpu_custom_call.1} parent=91 // pred_check_branch
          %2283 = sbr.rel (%p2281) target = $region108
        $region107: #{tpu_custom_call.1} parent=91 // pred_region
          %p2284 = scmp.lt.s32.totalorder %s47, 2
          %s2285 = scalar_select %p2284, %s47, 2
          %s2286 = smul.addr %s2285, 8
          %s2287 = scalar_lea.vmem %s18, %s2286
        $region108: #{tpu_custom_call.1} parent=91 // pred_fallthru
          _
      $region92: #{tpu_custom_call.1} parent=5 // pred_fallthru
        _
    $region6: #{tpu_custom_call.1} parent=1 // loop_footer
      %s45 = sadd.s32 1, %s41
    $region7: #{tpu_custom_call.1} parent=1 // loop_footer_branch
      %40 = sbr.rel target = $region3
    $region8: #{tpu_custom_call.1} parent=1 // loop_exit
      _
    %2288 = vsyncpa [#allocation6], 1
    %s2289 = scalar_lea.sflag [#allocation6], 1
    %2290 = vsyncpa %s2289, 1
    %2291 = vsyncpa [#allocation8], 1
    %s2292 = scalar_lea.sflag [#allocation8], 1
    %2293 = vsyncpa %s2292, 1

</llo_original>
